<compile_context>
chip_gen: v7x
topology: tpu7x:2x2x1
jax: 0.10.0
libtpu: 0.0.40
codegen_flags: <defaults>
</compile_context>

<pallas_src>
import jax
import jax.numpy as jnp
from jax import lax
from jax.experimental import pallas as pl
from jax.experimental.pallas import tpu as pltpu


def _round_up(x, m):
    return ((x + m - 1) // m) * m


def _pick_tn(Np):
    """Largest lane-dense tile dividing Np that still gives >= 2 N-tiles."""
    cands = [t for t in (2048, 1024, 512, 256) if Np % t == 0]
    for t in cands:                       # descending: prefer big tiles
        if Np // t >= 2:
            return t
    return cands[-1]                      # Np == 256 -> single tile, unavoidable


# ----------------------------------------------------------------------------
# Fused scoring kernel: (sigmoid(Xc @ E2c.T + b) + sigmoid(Qx @ Kx.T)) / 2
# ----------------------------------------------------------------------------
_NT = (((1,), (1,)), ((), ()))   # contract dim 1 of both operands (A @ B.T)


def _sigmoid(x):
    # EUP-friendly: exp on EUP, approx reciprocal on EUP vrcp (no full divide).
    return pl.reciprocal(1.0 + jnp.exp(-x), approx=True)


def _hypere_score_kernel(xc_ref, e2c_ref, b_ref, qx_ref, kx_ref, out_ref):
    # ConvE half: store immediately to shorten the live range of the f32 temp.
    s_conve = lax.dot_general(xc_ref[...], e2c_ref[...], _NT,
                              preferred_element_type=jnp.float32)
    s_conve = s_conve + b_ref[...]                          # (1, tn) broadcast
    out_ref[...] = (0.5 * _sigmoid(s_conve)).astype(out_ref.dtype)
    # ComplEx half (single folded matmul), accumulated into the output tile.
    s_cplx = lax.dot_general(qx_ref[...], kx_ref[...], _NT,
                             preferred_element_type=jnp.float32)
    out_ref[...] = out_ref[...] + (0.5 * _sigmoid(s_cplx)).astype(out_ref.dtype)


def prepare_hypere_tables(params, *, n_quantum=256):
    """One-time table prep (concat / pad / bf16 cast) — hoisted out of the
    per-call path so the big tables are not re-read/re-written every forward."""
    E2c = params["conve_ent"]                                        # (N, D)
    Kx = jnp.concatenate([params["cx_ent_real"],
                          params["cx_ent_img"]], axis=1)             # (N, 2*Dc)
    b = params["conve_b"]                                            # (N,)
    N = E2c.shape[0]
    Np = _round_up(N, n_quantum)
    return {
        "E2c": jnp.pad(E2c, ((0, Np - N), (0, 0))).astype(jnp.bfloat16),
        "Kx": jnp.pad(Kx, ((0, Np - N), (0, 0))).astype(jnp.bfloat16),
        "b2": jnp.pad(b, (0, Np - N)).reshape(1, Np).astype(jnp.float32),
        "N": N,
    }


def hypere_scores(Xc, Qx, tables, *, tb=None):
    """(sigmoid(Xc @ E2c.T + b) + sigmoid(Qx @ Kx.T)) / 2 -> (B, N) float32."""
    E2c, Kx, b2, N = tables["E2c"], tables["Kx"], tables["b2"], tables["N"]
    Np, D = E2c.shape
    Dx = Kx.shape[1]
    B = Xc.shape[0]
    assert Xc.shape[1] == D and Qx.shape == (B, Dx) and b2.shape == (1, Np)

    if tb is None:
        tb = min(128, _round_up(B, 16))     # >=16 for bf16 sublane packing
    Bp = _round_up(B, tb)
    tn = _pick_tn(Np)

    # Per-call padding only touches the small (B, D)/(B, Dx) query arrays.
    Xc = jnp.pad(Xc, ((0, Bp - B), (0, 0))).astype(jnp.bfloat16)
    Qx = jnp.pad(Qx, ((0, Bp - B), (0, 0))).astype(jnp.bfloat16)

    # Stream the larger operand exactly once from HBM:
    #   Bp <= tn : N outermost, entity tiles fetched once, tiny query tiles
    #              re-streamed per N-tile.
    #   Bp  > tn : B outermost, query tiles fetched once instead.
    n_outer = Bp <= tn
    if n_outer:
        grid = (Np // tn, Bp // tb)
        n_idx = lambda j, i: j
        b_idx = lambda j, i: i
    else:
        grid = (Bp // tb, Np // tn)
        n_idx = lambda i, j: j
        b_idx = lambda i, j: i

    out = pl.pallas_call(
        _hypere_score_kernel,
        out_shape=jax.ShapeDtypeStruct((Bp, Np), jnp.float32),
        grid_spec=pltpu.PrefetchScalarGridSpec(
            num_scalar_prefetch=0,
            grid=grid,
            in_specs=[
                pl.BlockSpec((tb, D), lambda *g: (b_idx(*g), 0)),   # ConvE features
                pl.BlockSpec((tn, D), lambda *g: (n_idx(*g), 0)),   # ConvE entity tile
                pl.BlockSpec((1, tn), lambda *g: (0, n_idx(*g))),   # ConvE bias
                pl.BlockSpec((tb, Dx), lambda *g: (b_idx(*g), 0)),  # ComplEx query
                pl.BlockSpec((tn, Dx), lambda *g: (n_idx(*g), 0)),  # ComplEx entity tile
            ],
            out_specs=pl.BlockSpec((tb, tn),
                                   lambda *g: (b_idx(*g), n_idx(*g))),
        ),
        compiler_params=pltpu.CompilerParams(
            dimension_semantics=("parallel", "parallel")),
    )(Xc, E2c, b2, Qx, Kx)
    return out[:B, :N]


# ----------------------------------------------------------------------------
# ConvE front-end (plain-JAX glue, eval mode: dropout = identity, BN = stats)
# ----------------------------------------------------------------------------
def _batchnorm(x, params, axis, eps=1e-5):
    gamma, beta, mean, var = params
    shape = [1] * x.ndim
    shape[axis] = x.shape[axis]
    return ((x - mean.reshape(shape)) * gamma.reshape(shape)
            * lax.rsqrt(var.reshape(shape) + eps) + beta.reshape(shape))


def conve_features(e1, r, p):
    d1, d2 = p["d1"], p["d2"]
    B = e1.shape[0]
    E1 = p["conve_ent"][e1].reshape(B, 1, d1, d2)
    R = p["conve_rel"][r].reshape(B, 1, d1, d2)
    x = jnp.concatenate([E1, R], axis=2)                  # (B, 1, 2*d1, d2)
    x = _batchnorm(x, p["bn0"], axis=1)
    x = lax.conv_general_dilated(
        x, p["conv_w"], window_strides=(1, 1), padding="VALID",
        dimension_numbers=("NCHW", "OIHW", "NCHW"))
    x = x + p["conv_b"][None, :, None, None]
    x = jax.nn.relu(x)
    x = x.reshape(B, -1)                                  # (B, feat_dim)
    x = x @ p["fc_w"].T + p["fc_b"]
    x = _batchnorm(x, p["bn2"], axis=1)
    x = jax.nn.relu(x)
    return x


def hypere_forward(e1, r, params, tables=None, *, tb=None):
    if tables is None:
        tables = prepare_hypere_tables(params)   # prefer building this once
    # ConvE feature head.
    Xc = conve_features(e1, r, params)                    # (B, D) f32
    # ComplEx packed query (built once per call, hoisted out of the N loop).
    E1r = params["cx_ent_real"][e1]
    E1i = params["cx_ent_img"][e1]
    Rr = params["cx_rel_real"][r]
    Ri = params["cx_rel_img"][r]
    Qx = jnp.concatenate([Rr * E1r - Ri * E1i, Rr * E1i + Ri * E1r], axis=1)
    return hypere_scores(Xc, Qx, tables, tb=tb)


def hypere_ref(e1, r, p):
    """Pure-JAX f32 reference matching the PyTorch HyperE.forward."""
    Xc = conve_features(e1, r, p)
    s_conve = jax.nn.sigmoid(Xc @ p["conve_ent"].T + p["conve_b"][None, :])
    E1r = p["cx_ent_real"][e1]; E1i = p["cx_ent_img"][e1]
    Rr = p["cx_rel_real"][r];   Ri = p["cx_rel_img"][r]
    E2r, E2i = p["cx_ent_real"], p["cx_ent_img"]
    rrr = (Rr * E1r) @ E2r.T
    rii = (Rr * E1i) @ E2i.T
    iri = (Ri * E1r) @ E2i.T
    iir = (Ri * E1i) @ E2r.T
    s_cplx = jax.nn.sigmoid(rrr + rii + iri - iir)
    return 0.5 * (s_conve + s_cplx)


if __name__ == "__main__":
    num_entities = 2000        # N (not a tile multiple -> exercises padding)
    num_relations = 16
    d1, d2 = 8, 16
    D = d1 * d2                # 128
    C = 4                      # conv out channels
    k = 3                      # conv kernel size
    batch = 10                 # B (not a tile multiple -> exercises padding)
    feat_dim = C * (2 * d1 - k + 1) * (d2 - k + 1)   # 4*14*14 = 784

    key = jax.random.PRNGKey(0)
    ks = jax.random.split(key, 24)
    nrm = jax.random.normal

    params = dict(
        d1=d1, d2=d2,
        # ConvE
        conve_ent=0.1 * nrm(ks[0], (num_entities, D), jnp.float32),
        conve_rel=0.1 * nrm(ks[1], (num_relations, D), jnp.float32),
        conve_b=0.1 * nrm(ks[2], (num_entities,), jnp.float32),
        conv_w=0.1 * nrm(ks[3], (C, 1, k, k), jnp.float32),
        conv_b=0.1 * nrm(ks[4], (C,), jnp.float32),
        bn0=(1.0 + 0.1 * nrm(ks[5], (1,), jnp.float32),
             0.1 * nrm(ks[6], (1,), jnp.float32),
             0.1 * nrm(ks[7], (1,), jnp.float32),
             1.0 + 0.1 * jnp.abs(nrm(ks[8], (1,), jnp.float32))),
        fc_w=0.05 * nrm(ks[9], (D, feat_dim), jnp.float32),
        fc_b=0.1 * nrm(ks[10], (D,), jnp.float32),
        bn2=(1.0 + 0.1 * nrm(ks[11], (D,), jnp.float32),
             0.1 * nrm(ks[12], (D,), jnp.float32),
             0.1 * nrm(ks[13], (D,), jnp.float32),
             1.0 + 0.1 * jnp.abs(nrm(ks[14], (D,), jnp.float32))),
        # ComplEx
        cx_ent_real=0.1 * nrm(ks[15], (num_entities, D), jnp.float32),
        cx_ent_img=0.1 * nrm(ks[16], (num_entities, D), jnp.float32),
        cx_rel_real=0.1 * nrm(ks[17], (num_relations, D), jnp.float32),
        cx_rel_img=0.1 * nrm(ks[18], (num_relations, D), jnp.float32),
    )

    # One-time table preparation (concat / pad-to-256 / bf16 cast), reused
    # across all forward calls.
    tables = jax.tree_util.tree_map(
        lambda x: jax.block_until_ready(x) if isinstance(x, jax.Array) else x,
        prepare_hypere_tables(params))

    e1 = jax.random.randint(ks[19], (batch,), 0, num_entities)
    r = jax.random.randint(ks[20], (batch,), 0, num_relations)

    S = hypere_forward(e1, r, params, tables)
    S = jax.block_until_ready(S)

    S_ref = hypere_ref(e1, r, params)
    assert S.shape == (batch, num_entities)
    max_err = float(jnp.max(jnp.abs(S - S_ref)))
    # bf16-streamed matmul operands + approx reciprocal -> loosened tolerance
    # vs. the f32 reference.
    assert max_err < 2e-2, f"max abs err {max_err}"

    print("KERNEL_OK")
</pallas_src>

<mosaic_0001>
module attributes {stable_mosaic.version = 11 : i64} {
  func.func @_hypere_score_kernel(%arg0: i32, %arg1: i32, %arg2: memref<16x128xbf16, #tpu.memory_space<vmem>>, %arg3: memref<1024x128xbf16, #tpu.memory_space<vmem>>, %arg4: memref<1x1024xf32, #tpu.memory_space<vmem>>, %arg5: memref<16x256xbf16, #tpu.memory_space<vmem>>, %arg6: memref<1024x256xbf16, #tpu.memory_space<vmem>>, %arg7: memref<16x1024xf32, #tpu.memory_space<vmem>>) attributes {dimension_semantics = [#tpu.dimension_semantics<parallel>, #tpu.dimension_semantics<parallel>], iteration_bounds = array<i64: 2, 1>, scalar_prefetch = 0 : i64, scratch_operands = 0 : i64, tpu.core_type = #tpu.core_type<tc>, window_params = [{transform_indices = @transform_0, window_bounds = array<i64: 16, 128>}, {transform_indices = @transform_1, window_bounds = array<i64: 1024, 128>}, {transform_indices = @transform_2, window_bounds = array<i64: 1, 1024>}, {transform_indices = @transform_3, window_bounds = array<i64: 16, 256>}, {transform_indices = @transform_4, window_bounds = array<i64: 1024, 256>}, {transform_indices = @transform_5, window_bounds = array<i64: 16, 1024>}]} {
    %c0 = arith.constant 0 : index
    %c0_0 = arith.constant 0 : index
    %0 = vector.load %arg2[%c0, %c0_0] : memref<16x128xbf16, #tpu.memory_space<vmem>>, vector<16x128xbf16>
    %c0_1 = arith.constant 0 : index
    %c0_2 = arith.constant 0 : index
    %1 = vector.load %arg3[%c0_1, %c0_2] : memref<1024x128xbf16, #tpu.memory_space<vmem>>, vector<1024x128xbf16>
    %cst = arith.constant dense<0.000000e+00> : vector<16x1024xf32>
    %2 = tpu.matmul %0, %1, %cst {dimension_numbers = #tpu.dot_dimension_numbers<[1], [1], [0], [0], [0, 0, 1, 0], [], []>} : vector<16x128xbf16>, vector<1024x128xbf16>, vector<16x1024xf32> -> vector<16x1024xf32>
    %c0_3 = arith.constant 0 : index
    %c0_4 = arith.constant 0 : index
    %3 = vector.load %arg4[%c0_3, %c0_4] : memref<1x1024xf32, #tpu.memory_space<vmem>>, vector<1x1024xf32>
    %4 = vector.broadcast %3 : vector<1x1024xf32> to vector<16x1024xf32>
    %5 = arith.addf %2, %4 : vector<16x1024xf32>
    %cst_5 = arith.constant 0.000000e+00 : f32
    %6 = vector.broadcast %cst_5 : f32 to vector<16x1024xf32>
    %7 = arith.subf %6, %5 : vector<16x1024xf32>
    %8 = math.exp %7 : vector<16x1024xf32>
    %cst_6 = arith.constant 1.000000e+00 : f32
    %9 = vector.broadcast %cst_6 : f32 to vector<16x1024xf32>
    %10 = arith.addf %9, %8 : vector<16x1024xf32>
    %11 = tpu.reciprocal %10 {approx = true} : vector<16x1024xf32> -> vector<16x1024xf32>
    %cst_7 = arith.constant 5.000000e-01 : f32
    %12 = vector.broadcast %cst_7 : f32 to vector<16x1024xf32>
    %13 = arith.mulf %12, %11 : vector<16x1024xf32>
    %c0_8 = arith.constant 0 : index
    %c0_9 = arith.constant 0 : index
    %14 = vector.load %arg7[%c0_8, %c0_9] : memref<16x1024xf32, #tpu.memory_space<vmem>>, vector<16x1024xf32>
    tpu.vector_store %arg7[%c0_8, %c0_9], %13 {strides = array<i32>} : memref<16x1024xf32, #tpu.memory_space<vmem>>, vector<16x1024xf32>,
    %c0_10 = arith.constant 0 : index
    %c0_11 = arith.constant 0 : index
    %15 = vector.load %arg5[%c0_10, %c0_11] : memref<16x256xbf16, #tpu.memory_space<vmem>>, vector<16x256xbf16>
    %c0_12 = arith.constant 0 : index
    %c0_13 = arith.constant 0 : index
    %16 = vector.load %arg6[%c0_12, %c0_13] : memref<1024x256xbf16, #tpu.memory_space<vmem>>, vector<1024x256xbf16>
    %cst_14 = arith.constant dense<0.000000e+00> : vector<16x1024xf32>
    %17 = tpu.matmul %15, %16, %cst_14 {dimension_numbers = #tpu.dot_dimension_numbers<[1], [1], [0], [0], [0, 0, 1, 0], [], []>} : vector<16x256xbf16>, vector<1024x256xbf16>, vector<16x1024xf32> -> vector<16x1024xf32>
    %c0_15 = arith.constant 0 : index
    %c0_16 = arith.constant 0 : index
    %18 = vector.load %arg7[%c0_15, %c0_16] : memref<16x1024xf32, #tpu.memory_space<vmem>>, vector<16x1024xf32>
    %cst_17 = arith.constant 0.000000e+00 : f32
    %19 = vector.broadcast %cst_17 : f32 to vector<16x1024xf32>
    %20 = arith.subf %19, %17 : vector<16x1024xf32>
    %21 = math.exp %20 : vector<16x1024xf32>
    %cst_18 = arith.constant 1.000000e+00 : f32
    %22 = vector.broadcast %cst_18 : f32 to vector<16x1024xf32>
    %23 = arith.addf %22, %21 : vector<16x1024xf32>
    %24 = tpu.reciprocal %23 {approx = true} : vector<16x1024xf32> -> vector<16x1024xf32>
    %cst_19 = arith.constant 5.000000e-01 : f32
    %25 = vector.broadcast %cst_19 : f32 to vector<16x1024xf32>
    %26 = arith.mulf %25, %24 : vector<16x1024xf32>
    %27 = arith.addf %18, %26 : vector<16x1024xf32>
    %c0_20 = arith.constant 0 : index
    %c0_21 = arith.constant 0 : index
    %28 = vector.load %arg7[%c0_20, %c0_21] : memref<16x1024xf32, #tpu.memory_space<vmem>>, vector<16x1024xf32>
    tpu.vector_store %arg7[%c0_20, %c0_21], %27 {strides = array<i32>} : memref<16x1024xf32, #tpu.memory_space<vmem>>, vector<16x1024xf32>,
    return
  }
  func.func @transform_0(%arg0: i32, %arg1: i32) -> (i32, i32) {
    %c0_i32 = arith.constant 0 : i32
    %c0_i32_0 = arith.constant 0 : i32
    return %arg1, %c0_i32 : i32, i32
  }
  func.func @transform_1(%arg0: i32, %arg1: i32) -> (i32, i32) {
    %c0_i32 = arith.constant 0 : i32
    %c0_i32_0 = arith.constant 0 : i32
    return %arg0, %c0_i32 : i32, i32
  }
  func.func @transform_2(%arg0: i32, %arg1: i32) -> (i32, i32) {
    %c0_i32 = arith.constant 0 : i32
    %c0_i32_0 = arith.constant 0 : i32
    return %c0_i32, %arg0 : i32, i32
  }
  func.func @transform_3(%arg0: i32, %arg1: i32) -> (i32, i32) {
    %c0_i32 = arith.constant 0 : i32
    %c0_i32_0 = arith.constant 0 : i32
    return %arg1, %c0_i32 : i32, i32
  }
  func.func @transform_4(%arg0: i32, %arg1: i32) -> (i32, i32) {
    %c0_i32 = arith.constant 0 : i32
    %c0_i32_0 = arith.constant 0 : i32
    return %arg0, %c0_i32 : i32, i32
  }
  func.func @transform_5(%arg0: i32, %arg1: i32) -> (i32, i32) {
    %c0_i32 = arith.constant 0 : i32
    return %arg1, %arg0 : i32, i32
  }
}

</mosaic_0001>

<llo_original>
// kernel: tpu_custom_call.1
$region0: #{tpu_custom_call.1}
  #allocation0 [shape = 'u32[]', space=smem, size = 0x4, offset = 0x4, fixed_abs, tag = 'smem constant byte address 0x4 - core index']
  #allocation1 [shape = 'u32[144,128]{1,0:T(1,128)}', space=vmem, size = 0x12000, scoped, tag = 'internal scratch']
  %s0 = inlined_call_operand.hbm [shape: bf16[16,128], index: 0, kind: input, shape index: {}]
  %s1 = inlined_call_operand.hbm [shape: bf16[2048,128], index: 1, kind: input, shape index: {}]
  %s2 = inlined_call_operand.hbm [shape: f32[1,2048], index: 2, kind: input, shape index: {}]
  %s3 = inlined_call_operand.hbm [shape: bf16[16,256], index: 3, kind: input, shape index: {}]
  %s4 = inlined_call_operand.hbm [shape: bf16[2048,256], index: 4, kind: input, shape index: {}]
  %s5 = inlined_call_operand.hbm [shape: f32[16,2048], index: 5, kind: output, shape index: {}]
  %s6 = sld [smem:[#allocation0]]
  $region73: #{tpu_custom_call.1} parent=0
    _
  %s8 = ssub.s32 1, %s6
  %s9 = scalar_select 0, %s8, %s6
  $region1: #{tpu_custom_call.1} parent=0
    #allocation2 [shape = 'u8[4096]{0}', space=vmem, size = 0x1000, scoped, tag = 'input window, operand 0, single buffered']
    #allocation3 [shape = 's32[2]{0}', space=sflag, size = 0x8, scoped, tag = 'scoped memory for tpu_custom_call.1']
    #allocation4 [shape = 's32[2]{0}', space=sflag, size = 0x8, scoped, tag = 'scoped memory for tpu_custom_call.1']
    #allocation5 [shape = 'u8[524288]{0}', space=vmem, size = 0x80000, scoped, tag = 'input window, operand 1']
    #allocation6 [shape = 's32[2]{0}', space=sflag, size = 0x8, scoped, tag = 'scoped memory for tpu_custom_call.1']
    #allocation7 [shape = 'u8[8192]{0}', space=vmem, size = 0x2000, scoped, tag = 'input window, operand 2']
    #allocation8 [shape = 'u8[8192]{0}', space=vmem, size = 0x2000, scoped, tag = 'input window, operand 3, single buffered']
    #allocation9 [shape = 's32[1]{0}', space=sflag, size = 0x4, scoped, tag = 'scoped memory for tpu_custom_call.1']
    #allocation10 [shape = 'u8[1048576]{0}', space=vmem, size = 0x100000, scoped, tag = 'input window, operand 4']
    #allocation11 [shape = 'u8[131072]{0}', space=vmem, size = 0x20000, scoped, tag = 'output window, operand 0']
    %10 = vsyncpa [#allocation3], 0
    %11 = vsyncpa [#allocation6], 0
    %s12 = scalar_lea.sflag [#allocation6], 1
    %13 = vsyncpa %s12, 0
    %14 = vsyncpa [#allocation9], 0
    %15 = vsyncpa [#allocation4], 0
    %s16 = scalar_lea.sflag [#allocation4], 1
    %17 = vsyncpa %s16, 0
    loop: start=0, step=1, limit=4
    $region2: #{tpu_custom_call.1} parent=1 // loop_pre_header
      _
    $region3: #{tpu_custom_call.1} parent=1 // loop_header
      %s19 = sphi 0, %s23
      %p20 = scmp.ge.s32.totalorder %s19, 4
      %s26 = sphi 0, %s38
      %s27 = sphi 0, %s34
      %s28 = sphi 0, %s26
      %s29 = sphi 0, %s27
      %s30 = sphi 0, %s28
      %s31 = sphi 0, %s29
      %s41 = sphi 0, %s43
      %s44 = sphi 0, %s41
      %s45 = sphi 0, %s44
      %s61 = sphi 0, %s45
      %s67 = sphi 0, %s69
      %s70 = sphi 0, %s67
      %s71 = sphi 0, %s70
      %s87 = sphi 0, %s71
      %s93 = sphi 0, %s95
      %s96 = sphi 0, %s93
      %s97 = sphi 0, %s96
      %s113 = sphi 0, %s97
      %s119 = sphi 0, %s121
      %s122 = sphi 0, %s119
      %s123 = sphi 0, %s122
      %s139 = sphi 0, %s123
      %s145 = sphi 0, %s147
      %s148 = sphi 0, %s145
      %s149 = sphi 0, %s148
      %s165 = sphi 0, %s149
      %s173 = sphi 0, %s175
      %s176 = sphi 0, %s173
      %s177 = sphi 0, %s176
      %s193 = sphi 0, %s177
    $region4: #{tpu_custom_call.1} parent=1 // loop_header_branch
      %22 = sbr.rel (%p20) target = $region8
    $region5: #{tpu_custom_call.1} parent=1 // loop_body
      %s24 = ssub.s32 %s19, 1
      %s25 = ssub.s32 %s19, 2
      %s32 = sadd.s32 1, %s27
      %p33 = scmp.ge.s32.totalorder %s32, 1
      %s34 = scalar_select %p33, 0, %s32
      %s35 = sadd.s32 1, %s26
      %s36 = scalar_select %p33, %s35, %s26
      %p37 = scmp.ge.s32.totalorder %s36, 2
      %s38 = scalar_select %p37, 0, %s36
      %s39 = ssub.s32 %s27, %s34
      %p40 = scmp.eq.s32.totalorder %s39, 0
      %s42 = sadd.s32 %s41, 1
      %s43 = scalar_select %p40, %s41, %s42
      %p46 = pneg %p40
      %p47 = scmp.eq.s32.totalorder %s19, 1
      %p48 = por %p46, %p47
      %p49 = scmp.ne.s32.totalorder %s41, %s44
      %p50 = scmp.eq.s32.totalorder %s19, 0
      %p51 = por %p49, %p50
      %p52 = scmp.ne.s32.totalorder %s41, %s44
      %p53 = scmp.eq.s32.totalorder %s24, 1
      %p54 = por %p52, %p53
      %p55 = scmp.ne.s32.totalorder %s44, %s45
      %p56 = scmp.eq.s32.totalorder %s24, 0
      %p57 = por %p55, %p56
      %p58 = scmp.ne.s32.totalorder %s44, %s45
      %p59 = scmp.eq.s32.totalorder %s25, 1
      %p60 = por %p58, %p59
      %p62 = scmp.ne.s32.totalorder %s45, %s61
      %p63 = scmp.eq.s32.totalorder %s25, 0
      %p64 = por %p62, %p63
      %s65 = ssub.s32 %s26, %s38
      %p66 = scmp.eq.s32.totalorder %s65, 0
      %s68 = sadd.s32 %s67, 1
      %s69 = scalar_select %p66, %s67, %s68
      %p72 = pneg %p66
      %p73 = scmp.eq.s32.totalorder %s19, 1
      %p74 = por %p72, %p73
      %p75 = scmp.ne.s32.totalorder %s67, %s70
      %p76 = scmp.eq.s32.totalorder %s19, 0
      %p77 = por %p75, %p76
      %p78 = scmp.ne.s32.totalorder %s67, %s70
      %p79 = scmp.eq.s32.totalorder %s24, 1
      %p80 = por %p78, %p79
      %p81 = scmp.ne.s32.totalorder %s70, %s71
      %p82 = scmp.eq.s32.totalorder %s24, 0
      %p83 = por %p81, %p82
      %p84 = scmp.ne.s32.totalorder %s70, %s71
      %p85 = scmp.eq.s32.totalorder %s25, 1
      %p86 = por %p84, %p85
      %p88 = scmp.ne.s32.totalorder %s71, %s87
      %p89 = scmp.eq.s32.totalorder %s25, 0
      %p90 = por %p88, %p89
      %s91 = ssub.s32 %s26, %s38
      %p92 = scmp.eq.s32.totalorder %s91, 0
      %s94 = sadd.s32 %s93, 1
      %s95 = scalar_select %p92, %s93, %s94
      %p98 = pneg %p92
      %p99 = scmp.eq.s32.totalorder %s19, 1
      %p100 = por %p98, %p99
      %p101 = scmp.ne.s32.totalorder %s93, %s96
      %p102 = scmp.eq.s32.totalorder %s19, 0
      %p103 = por %p101, %p102
      %p104 = scmp.ne.s32.totalorder %s93, %s96
      %p105 = scmp.eq.s32.totalorder %s24, 1
      %p106 = por %p104, %p105
      %p107 = scmp.ne.s32.totalorder %s96, %s97
      %p108 = scmp.eq.s32.totalorder %s24, 0
      %p109 = por %p107, %p108
      %p110 = scmp.ne.s32.totalorder %s96, %s97
      %p111 = scmp.eq.s32.totalorder %s25, 1
      %p112 = por %p110, %p111
      %p114 = scmp.ne.s32.totalorder %s97, %s113
      %p115 = scmp.eq.s32.totalorder %s25, 0
      %p116 = por %p114, %p115
      %s117 = ssub.s32 %s27, %s34
      %p118 = scmp.eq.s32.totalorder %s117, 0
      %s120 = sadd.s32 %s119, 1
      %s121 = scalar_select %p118, %s119, %s120
      %p124 = pneg %p118
      %p125 = scmp.eq.s32.totalorder %s19, 1
      %p126 = por %p124, %p125
      %p127 = scmp.ne.s32.totalorder %s119, %s122
      %p128 = scmp.eq.s32.totalorder %s19, 0
      %p129 = por %p127, %p128
      %p130 = scmp.ne.s32.totalorder %s119, %s122
      %p131 = scmp.eq.s32.totalorder %s24, 1
      %p132 = por %p130, %p131
      %p133 = scmp.ne.s32.totalorder %s122, %s123
      %p134 = scmp.eq.s32.totalorder %s24, 0
      %p135 = por %p133, %p134
      %p136 = scmp.ne.s32.totalorder %s122, %s123
      %p137 = scmp.eq.s32.totalorder %s25, 1
      %p138 = por %p136, %p137
      %p140 = scmp.ne.s32.totalorder %s123, %s139
      %p141 = scmp.eq.s32.totalorder %s25, 0
      %p142 = por %p140, %p141
      %s143 = ssub.s32 %s26, %s38
      %p144 = scmp.eq.s32.totalorder %s143, 0
      %s146 = sadd.s32 %s145, 1
      %s147 = scalar_select %p144, %s145, %s146
      %p150 = pneg %p144
      %p151 = scmp.eq.s32.totalorder %s19, 1
      %p152 = por %p150, %p151
      %p153 = scmp.ne.s32.totalorder %s145, %s148
      %p154 = scmp.eq.s32.totalorder %s19, 0
      %p155 = por %p153, %p154
      %p156 = scmp.ne.s32.totalorder %s145, %s148
      %p157 = scmp.eq.s32.totalorder %s24, 1
      %p158 = por %p156, %p157
      %p159 = scmp.ne.s32.totalorder %s148, %s149
      %p160 = scmp.eq.s32.totalorder %s24, 0
      %p161 = por %p159, %p160
      %p162 = scmp.ne.s32.totalorder %s148, %s149
      %p163 = scmp.eq.s32.totalorder %s25, 1
      %p164 = por %p162, %p163
      %p166 = scmp.ne.s32.totalorder %s149, %s165
      %p167 = scmp.eq.s32.totalorder %s25, 0
      %p168 = por %p166, %p167
      %s169 = ssub.s32 %s27, %s34
      %s170 = ssub.s32 %s26, %s38
      %s171 = sor.u32 %s169, %s170
      %p172 = scmp.eq.s32.totalorder %s171, 0
      %s174 = sadd.s32 %s173, 1
      %s175 = scalar_select %p172, %s173, %s174
      %p178 = pneg %p172
      %p179 = scmp.eq.s32.totalorder %s19, 1
      %p180 = por %p178, %p179
      %p181 = scmp.ne.s32.totalorder %s173, %s176
      %p182 = scmp.eq.s32.totalorder %s19, 0
      %p183 = por %p181, %p182
      %p184 = scmp.ne.s32.totalorder %s173, %s176
      %p185 = scmp.eq.s32.totalorder %s24, 1
      %p186 = por %p184, %p185
      %p187 = scmp.ne.s32.totalorder %s176, %s177
      %p188 = scmp.eq.s32.totalorder %s24, 0
      %p189 = por %p187, %p188
      %p190 = scmp.ne.s32.totalorder %s176, %s177
      %p191 = scmp.eq.s32.totalorder %s25, 1
      %p192 = por %p190, %p191
      %p194 = scmp.ne.s32.totalorder %s177, %s193
      %p195 = scmp.eq.s32.totalorder %s25, 0
      %p196 = por %p194, %p195
      %p197 = scmp.le.s32.totalorder 1, %s19
      %p198 = scmp.lt.s32.totalorder %s19, 3
      %p199 = pnand %p197, %p198
      %p200 = pneg %p199
      // Predicated region
      $region9: #{tpu_custom_call.1} parent=5 // pred_check
        _
      $region10: #{tpu_custom_call.1} parent=5 // pred_check_branch
        %202 = sbr.rel (%p199) target = $region12
      $region11: #{tpu_custom_call.1} parent=5 // pred_region
        %s203 = ssub.s32 %s19, 1
        // Predicated region
        $region13: #{tpu_custom_call.1} parent=11 // pred_check
          %p204 = pneg %p57
        $region14: #{tpu_custom_call.1} parent=11 // pred_check_branch
          %206 = sbr.rel (%p204) target = $region16
        $region15: #{tpu_custom_call.1} parent=11 // pred_region
          %s207 = smul.u32 2, %s29
          %s209 = ssub.s32 128, 128
          %210 = vsyncadd [#allocation3], %s209
          %s211 = smul.addr %s207, 64
          %s212 = scalar_lea.hbm %s0, %s211
          %s213 = sshll.u32 [#allocation2], 4
          %s214 = int_to_ptr.vmem [resolvable:$true] %s213
          %219 = dma.hbm_to_vmem [thread:$0]  %s212, 128, %s214, [#allocation3], 64, 64, 4
        $region16: #{tpu_custom_call.1} parent=11 // pred_fallthru
          _
        // Predicated region
        $region17: #{tpu_custom_call.1} parent=11 // pred_check
          %p220 = pneg %p135
        $region18: #{tpu_custom_call.1} parent=11 // pred_check_branch
          %222 = sbr.rel (%p220) target = $region20
        $region19: #{tpu_custom_call.1} parent=11 // pred_region
          %s223 = smul.u32 2, %s29
          %s225 = ssub.s32 256, 256
          %226 = vsyncadd [#allocation9], %s225
          %s227 = smul.addr %s223, 2
          %s228 = smul.addr %s227, 64
          %s229 = scalar_lea.hbm %s3, %s228
          %s230 = sshll.u32 [#allocation8], 4
          %s231 = int_to_ptr.vmem [resolvable:$true] %s230
          %236 = dma.hbm_to_vmem [thread:$0]  %s229, 256, %s231, [#allocation9], 128, 128, 8
        $region20: #{tpu_custom_call.1} parent=11 // pred_fallthru
          _
      $region12: #{tpu_custom_call.1} parent=5 // pred_fallthru
        _
      %p237 = scmp.lt.s32.totalorder %s19, 2
      // Predicated region
      $region21: #{tpu_custom_call.1} parent=5 // pred_check
        %p238 = pneg %p237
      $region22: #{tpu_custom_call.1} parent=5 // pred_check_branch
        %240 = sbr.rel (%p238) target = $region24
      $region23: #{tpu_custom_call.1} parent=5 // pred_region
        // Predicated region
        $region25: #{tpu_custom_call.1} parent=23 // pred_check
          %p241 = pneg %p77
        $region26: #{tpu_custom_call.1} parent=23 // pred_check_branch
          %243 = sbr.rel (%p241) target = $region28
        $region27: #{tpu_custom_call.1} parent=23 // pred_region
          %s244 = sand.u32 %s19, 1
          %s245 = scalar_lea.sflag [#allocation6], %s244
          %s246 = sand.u32 %s67, 1
          %s247 = smul.addr %s246, 512
          %s248 = scalar_lea.vmem [#allocation5], %s247
          %s249 = smul.u32 128, %s26
          %s251 = ssub.s32 8192, 8192
          %252 = vsyncadd %s245, %s251
          %s253 = smul.addr %s249, 64
          %s254 = scalar_lea.hbm %s1, %s253
          %s255 = sshll.u32 %s248, 4
          %s256 = int_to_ptr.vmem [resolvable:$true] %s255
          %261 = dma.hbm_to_vmem [thread:$0]  %s254, 8192, %s256, %s245, 64, 64, 4
        $region28: #{tpu_custom_call.1} parent=23 // pred_fallthru
          _
        // Predicated region
        $region29: #{tpu_custom_call.1} parent=23 // pred_check
          %p262 = pneg %p103
        $region30: #{tpu_custom_call.1} parent=23 // pred_check_branch
          %264 = sbr.rel (%p262) target = $region32
        $region31: #{tpu_custom_call.1} parent=23 // pred_region
          %s265 = sand.u32 %s19, 1
          %s266 = scalar_lea.sflag [#allocation6], %s265
          %s267 = sand.u32 %s93, 1
          %s268 = smul.addr %s267, 8
          %s269 = scalar_lea.vmem [#allocation7], %s268
          %s270 = smul.u32 8, %s26
          %s272 = ssub.s32 128, 128
          %273 = vsyncadd %s266, %s272
          %s274 = smul.addr %s270, 16
          %s275 = scalar_lea.hbm %s2, %s274
          %s277 = sshll.u32 %s269, 4
          %s278 = int_to_ptr.vmem [resolvable:$true] %s277
          %280 = dma.hbm_to_vmem [thread:$0]  %s275, 128, %s278, %s266
        $region32: #{tpu_custom_call.1} parent=23 // pred_fallthru
          _
        // Predicated region
        $region33: #{tpu_custom_call.1} parent=23 // pred_check
          %p281 = pneg %p155
        $region34: #{tpu_custom_call.1} parent=23 // pred_check_branch
          %283 = sbr.rel (%p281) target = $region36
        $region35: #{tpu_custom_call.1} parent=23 // pred_region
          %s284 = sand.u32 %s19, 1
          %s285 = scalar_lea.sflag [#allocation3], %s284
          %s286 = sand.u32 %s145, 1
          %s287 = smul.addr %s286, 1024
          %s288 = scalar_lea.vmem [#allocation10], %s287
          %s289 = smul.u32 128, %s26
          %s291 = ssub.s32 16384, 16384
          %292 = vsyncadd %s285, %s291
          %s293 = smul.addr %s289, 2
          %s294 = smul.addr %s293, 64
          %s295 = scalar_lea.hbm %s4, %s294
          %s296 = sshll.u32 %s288, 4
          %s297 = int_to_ptr.vmem [resolvable:$true] %s296
          %302 = dma.hbm_to_vmem [thread:$0]  %s295, 16384, %s297, %s285, 128, 128, 8
        $region36: #{tpu_custom_call.1} parent=23 // pred_fallthru
          _
      $region24: #{tpu_custom_call.1} parent=5 // pred_fallthru
        _
      %p303 = scmp.le.s32.totalorder 1, %s19
      %p304 = scmp.lt.s32.totalorder %s19, 3
      %p305 = pnand %p303, %p304
      %p306 = pneg %p305
      // Predicated region
      $region37: #{tpu_custom_call.1} parent=5 // pred_check
        _
      $region38: #{tpu_custom_call.1} parent=5 // pred_check_branch
        %308 = sbr.rel (%p305) target = $region40
      $region39: #{tpu_custom_call.1} parent=5 // pred_region
        %s309 = ssub.s32 %s19, 1
        // Predicated region
        $region41: #{tpu_custom_call.1} parent=39 // pred_check
          %p310 = pneg %p57
        $region42: #{tpu_custom_call.1} parent=39 // pred_check_branch
          %312 = sbr.rel (%p310) target = $region44
        $region43: #{tpu_custom_call.1} parent=39 // pred_region
          %313 = dma.done [#allocation3], 128
        $region44: #{tpu_custom_call.1} parent=39 // pred_fallthru
          _
        %s314 = sand.u32 %s24, 1
        %s315 = scalar_lea.sflag [#allocation6], %s314
        %s316 = sand.u32 %s70, 1
        %s317 = smul.addr %s316, 512
        %s318 = scalar_lea.vmem [#allocation5], %s317
        // Predicated region
        $region45: #{tpu_custom_call.1} parent=39 // pred_check
          %p319 = pneg %p83
        $region46: #{tpu_custom_call.1} parent=39 // pred_check_branch
          %321 = sbr.rel (%p319) target = $region48
        $region47: #{tpu_custom_call.1} parent=39 // pred_region
          %322 = dma.done %s315, 8192
        $region48: #{tpu_custom_call.1} parent=39 // pred_fallthru
          _
        %s323 = sand.u32 %s24, 1
        %s324 = scalar_lea.sflag [#allocation6], %s323
        %s325 = sand.u32 %s96, 1
        %s326 = smul.addr %s325, 8
        %s327 = scalar_lea.vmem [#allocation7], %s326
        // Predicated region
        $region49: #{tpu_custom_call.1} parent=39 // pred_check
          %p328 = pneg %p109
        $region50: #{tpu_custom_call.1} parent=39 // pred_check_branch
          %330 = sbr.rel (%p328) target = $region52
        $region51: #{tpu_custom_call.1} parent=39 // pred_region
          %331 = dma.done %s324, 128
        $region52: #{tpu_custom_call.1} parent=39 // pred_fallthru
          _
        // Predicated region
        $region53: #{tpu_custom_call.1} parent=39 // pred_check
          %p332 = pneg %p135
        $region54: #{tpu_custom_call.1} parent=39 // pred_check_branch
          %334 = sbr.rel (%p332) target = $region56
        $region55: #{tpu_custom_call.1} parent=39 // pred_region
          %335 = dma.done [#allocation9], 256
        $region56: #{tpu_custom_call.1} parent=39 // pred_fallthru
          _
        %s336 = sand.u32 %s24, 1
        %s337 = scalar_lea.sflag [#allocation3], %s336
        %s338 = sand.u32 %s148, 1
        %s339 = smul.addr %s338, 1024
        %s340 = scalar_lea.vmem [#allocation10], %s339
        // Predicated region
        $region57: #{tpu_custom_call.1} parent=39 // pred_check
          %p341 = pneg %p161
        $region58: #{tpu_custom_call.1} parent=39 // pred_check_branch
          %343 = sbr.rel (%p341) target = $region60
        $region59: #{tpu_custom_call.1} parent=39 // pred_region
          %344 = dma.done %s337, 16384
        $region60: #{tpu_custom_call.1} parent=39 // pred_fallthru
          _
        %p345 = pneg %p57
        %p346 = pneg %p54
        %s347 = sand.u32 %s24, 1
        %s348 = scalar_lea.sflag [#allocation6], %s347
        %s349 = sand.u32 %s70, 1
        %s350 = smul.addr %s349, 512
        %s351 = scalar_lea.vmem [#allocation5], %s350
        %p352 = pneg %p83
        %p353 = pneg %p80
        %s354 = sand.u32 %s24, 1
        %s355 = scalar_lea.sflag [#allocation6], %s354
        %s356 = sand.u32 %s96, 1
        %s357 = smul.addr %s356, 8
        %s358 = scalar_lea.vmem [#allocation7], %s357
        %p359 = pneg %p109
        %p360 = pneg %p106
        %p361 = pneg %p135
        %p362 = pneg %p132
        %s363 = sand.u32 %s24, 1
        %s364 = scalar_lea.sflag [#allocation3], %s363
        %s365 = sand.u32 %s148, 1
        %s366 = smul.addr %s365, 1024
        %s367 = scalar_lea.vmem [#allocation10], %s366
        %p368 = pneg %p161
        %p369 = pneg %p158
        %p370 = pneg %p189
        %p371 = pneg %p186
        %s372 = sand.u32 %s176, 1
        %s373 = scalar_lea.sflag [#allocation4], %s372
        %s374 = sand.u32 %s176, 1
        %s375 = smul.addr %s374, 128
        %s376 = scalar_lea.vmem [#allocation11], %s375
        %s377 = smul.u32 2, %s29
        %s378 = smul.u32 128, %s28
        %s379 = smul.u32 8, %s28
        %s380 = smul.u32 2, %s29
        %s381 = smul.u32 128, %s28
        %s382 = smul.u32 2, %s29
        %s383 = smul.u32 8, %s28
        %v385 = vld [vmem:[#allocation2] sm:$0xf]
        %v386 = vld [vmem:[#allocation2 + $0x4] sm:$0xf]
        %v387 = vld [vmem:[%s318] sm:$0xf]
        %v388 = vld [vmem:[%s318 + $0x4] sm:$0xf]
        %v389 = vld [vmem:[%s318 + $0x8] sm:$0xf]
        %v390 = vld [vmem:[%s318 + $0xc] sm:$0xf]
        %v391 = vld [vmem:[%s318 + $0x10] sm:$0xf]
        %v392 = vld [vmem:[%s318 + $0x14] sm:$0xf]
        %v393 = vld [vmem:[%s318 + $0x18] sm:$0xf]
        %v394 = vld [vmem:[%s318 + $0x1c] sm:$0xf]
        %v395 = vld [vmem:[%s318 + $0x20] sm:$0xf]
        %v396 = vld [vmem:[%s318 + $0x24] sm:$0xf]
        %v397 = vld [vmem:[%s318 + $0x28] sm:$0xf]
        %v398 = vld [vmem:[%s318 + $0x2c] sm:$0xf]
        %v399 = vld [vmem:[%s318 + $0x30] sm:$0xf]
        %v400 = vld [vmem:[%s318 + $0x34] sm:$0xf]
        %v401 = vld [vmem:[%s318 + $0x38] sm:$0xf]
        %v402 = vld [vmem:[%s318 + $0x3c] sm:$0xf]
        %v403 = vld [vmem:[%s318 + $0x40] sm:$0xf]
        %v404 = vld [vmem:[%s318 + $0x44] sm:$0xf]
        %v405 = vld [vmem:[%s318 + $0x48] sm:$0xf]
        %v406 = vld [vmem:[%s318 + $0x4c] sm:$0xf]
        %v407 = vld [vmem:[%s318 + $0x50] sm:$0xf]
        %v408 = vld [vmem:[%s318 + $0x54] sm:$0xf]
        %v409 = vld [vmem:[%s318 + $0x58] sm:$0xf]
        %v410 = vld [vmem:[%s318 + $0x5c] sm:$0xf]
        %v411 = vld [vmem:[%s318 + $0x60] sm:$0xf]
        %v412 = vld [vmem:[%s318 + $0x64] sm:$0xf]
        %v413 = vld [vmem:[%s318 + $0x68] sm:$0xf]
        %v414 = vld [vmem:[%s318 + $0x6c] sm:$0xf]
        %v415 = vld [vmem:[%s318 + $0x70] sm:$0xf]
        %v416 = vld [vmem:[%s318 + $0x74] sm:$0xf]
        %v417 = vld [vmem:[%s318 + $0x78] sm:$0xf]
        %v418 = vld [vmem:[%s318 + $0x7c] sm:$0xf]
        %v419 = vld [vmem:[%s318 + $0x80] sm:$0xf]
        %v420 = vld [vmem:[%s318 + $0x84] sm:$0xf]
        %v421 = vld [vmem:[%s318 + $0x88] sm:$0xf]
        %v422 = vld [vmem:[%s318 + $0x8c] sm:$0xf]
        %v423 = vld [vmem:[%s318 + $0x90] sm:$0xf]
        %v424 = vld [vmem:[%s318 + $0x94] sm:$0xf]
        %v425 = vld [vmem:[%s318 + $0x98] sm:$0xf]
        %v426 = vld [vmem:[%s318 + $0x9c] sm:$0xf]
        %v427 = vld [vmem:[%s318 + $0xa0] sm:$0xf]
        %v428 = vld [vmem:[%s318 + $0xa4] sm:$0xf]
        %v429 = vld [vmem:[%s318 + $0xa8] sm:$0xf]
        %v430 = vld [vmem:[%s318 + $0xac] sm:$0xf]
        %v431 = vld [vmem:[%s318 + $0xb0] sm:$0xf]
        %v432 = vld [vmem:[%s318 + $0xb4] sm:$0xf]
        %v433 = vld [vmem:[%s318 + $0xb8] sm:$0xf]
        %v434 = vld [vmem:[%s318 + $0xbc] sm:$0xf]
        %v435 = vld [vmem:[%s318 + $0xc0] sm:$0xf]
        %v436 = vld [vmem:[%s318 + $0xc4] sm:$0xf]
        %v437 = vld [vmem:[%s318 + $0xc8] sm:$0xf]
        %v438 = vld [vmem:[%s318 + $0xcc] sm:$0xf]
        %v439 = vld [vmem:[%s318 + $0xd0] sm:$0xf]
        %v440 = vld [vmem:[%s318 + $0xd4] sm:$0xf]
        %v441 = vld [vmem:[%s318 + $0xd8] sm:$0xf]
        %v442 = vld [vmem:[%s318 + $0xdc] sm:$0xf]
        %v443 = vld [vmem:[%s318 + $0xe0] sm:$0xf]
        %v444 = vld [vmem:[%s318 + $0xe4] sm:$0xf]
        %v445 = vld [vmem:[%s318 + $0xe8] sm:$0xf]
        %v446 = vld [vmem:[%s318 + $0xec] sm:$0xf]
        %v447 = vld [vmem:[%s318 + $0xf0] sm:$0xf]
        %v448 = vld [vmem:[%s318 + $0xf4] sm:$0xf]
        %v449 = vld [vmem:[%s318 + $0xf8] sm:$0xf]
        %v450 = vld [vmem:[%s318 + $0xfc] sm:$0xf]
        %v451 = vld [vmem:[%s318 + $0x100] sm:$0xf]
        %v452 = vld [vmem:[%s318 + $0x104] sm:$0xf]
        %v453 = vld [vmem:[%s318 + $0x108] sm:$0xf]
        %v454 = vld [vmem:[%s318 + $0x10c] sm:$0xf]
        %v455 = vld [vmem:[%s318 + $0x110] sm:$0xf]
        %v456 = vld [vmem:[%s318 + $0x114] sm:$0xf]
        %v457 = vld [vmem:[%s318 + $0x118] sm:$0xf]
        %v458 = vld [vmem:[%s318 + $0x11c] sm:$0xf]
        %v459 = vld [vmem:[%s318 + $0x120] sm:$0xf]
        %v460 = vld [vmem:[%s318 + $0x124] sm:$0xf]
        %v461 = vld [vmem:[%s318 + $0x128] sm:$0xf]
        %v462 = vld [vmem:[%s318 + $0x12c] sm:$0xf]
        %v463 = vld [vmem:[%s318 + $0x130] sm:$0xf]
        %v464 = vld [vmem:[%s318 + $0x134] sm:$0xf]
        %v465 = vld [vmem:[%s318 + $0x138] sm:$0xf]
        %v466 = vld [vmem:[%s318 + $0x13c] sm:$0xf]
        %v467 = vld [vmem:[%s318 + $0x140] sm:$0xf]
        %v468 = vld [vmem:[%s318 + $0x144] sm:$0xf]
        %v469 = vld [vmem:[%s318 + $0x148] sm:$0xf]
        %v470 = vld [vmem:[%s318 + $0x14c] sm:$0xf]
        %v471 = vld [vmem:[%s318 + $0x150] sm:$0xf]
        %v472 = vld [vmem:[%s318 + $0x154] sm:$0xf]
        %v473 = vld [vmem:[%s318 + $0x158] sm:$0xf]
        %v474 = vld [vmem:[%s318 + $0x15c] sm:$0xf]
        %v475 = vld [vmem:[%s318 + $0x160] sm:$0xf]
        %v476 = vld [vmem:[%s318 + $0x164] sm:$0xf]
        %v477 = vld [vmem:[%s318 + $0x168] sm:$0xf]
        %v478 = vld [vmem:[%s318 + $0x16c] sm:$0xf]
        %v479 = vld [vmem:[%s318 + $0x170] sm:$0xf]
        %v480 = vld [vmem:[%s318 + $0x174] sm:$0xf]
        %v481 = vld [vmem:[%s318 + $0x178] sm:$0xf]
        %v482 = vld [vmem:[%s318 + $0x17c] sm:$0xf]
        %v483 = vld [vmem:[%s318 + $0x180] sm:$0xf]
        %v484 = vld [vmem:[%s318 + $0x184] sm:$0xf]
        %v485 = vld [vmem:[%s318 + $0x188] sm:$0xf]
        %v486 = vld [vmem:[%s318 + $0x18c] sm:$0xf]
        %v487 = vld [vmem:[%s318 + $0x190] sm:$0xf]
        %v488 = vld [vmem:[%s318 + $0x194] sm:$0xf]
        %v489 = vld [vmem:[%s318 + $0x198] sm:$0xf]
        %v490 = vld [vmem:[%s318 + $0x19c] sm:$0xf]
        %v491 = vld [vmem:[%s318 + $0x1a0] sm:$0xf]
        %v492 = vld [vmem:[%s318 + $0x1a4] sm:$0xf]
        %v493 = vld [vmem:[%s318 + $0x1a8] sm:$0xf]
        %v494 = vld [vmem:[%s318 + $0x1ac] sm:$0xf]
        %v495 = vld [vmem:[%s318 + $0x1b0] sm:$0xf]
        %v496 = vld [vmem:[%s318 + $0x1b4] sm:$0xf]
        %v497 = vld [vmem:[%s318 + $0x1b8] sm:$0xf]
        %v498 = vld [vmem:[%s318 + $0x1bc] sm:$0xf]
        %v499 = vld [vmem:[%s318 + $0x1c0] sm:$0xf]
        %v500 = vld [vmem:[%s318 + $0x1c4] sm:$0xf]
        %v501 = vld [vmem:[%s318 + $0x1c8] sm:$0xf]
        %v502 = vld [vmem:[%s318 + $0x1cc] sm:$0xf]
        %v503 = vld [vmem:[%s318 + $0x1d0] sm:$0xf]
        %v504 = vld [vmem:[%s318 + $0x1d4] sm:$0xf]
        %v505 = vld [vmem:[%s318 + $0x1d8] sm:$0xf]
        %v506 = vld [vmem:[%s318 + $0x1dc] sm:$0xf]
        %v507 = vld [vmem:[%s318 + $0x1e0] sm:$0xf]
        %v508 = vld [vmem:[%s318 + $0x1e4] sm:$0xf]
        %v509 = vld [vmem:[%s318 + $0x1e8] sm:$0xf]
        %v510 = vld [vmem:[%s318 + $0x1ec] sm:$0xf]
        %v511 = vld [vmem:[%s318 + $0x1f0] sm:$0xf]
        %v512 = vld [vmem:[%s318 + $0x1f4] sm:$0xf]
        %v513 = vld [vmem:[%s318 + $0x1f8] sm:$0xf]
        %v514 = vld [vmem:[%s318 + $0x1fc] sm:$0xf]
        %v515 = vld [vmem:[%s327] sm:$0xff]
        %v517 = vlaneseq
        %v518 = vshrl.u32 %v517, 7
        %v519 = vsub.s32 0, %v518
        %v520 = vrot.slane %v515, %v519
        %v521 = vlaneseq
        %v522 = vshrl.u32 %v521, 7
        %v523 = vsub.s32 1, %v522
        %v524 = vrot.slane %v515, %v523
        %v525 = vlaneseq
        %v526 = vshrl.u32 %v525, 7
        %v527 = vsub.s32 2, %v526
        %v528 = vrot.slane %v515, %v527
        %v529 = vlaneseq
        %v530 = vshrl.u32 %v529, 7
        %v531 = vsub.s32 3, %v530
        %v532 = vrot.slane %v515, %v531
        %v533 = vlaneseq
        %v534 = vshrl.u32 %v533, 7
        %v535 = vsub.s32 4, %v534
        %v536 = vrot.slane %v515, %v535
        %v537 = vlaneseq
        %v538 = vshrl.u32 %v537, 7
        %v539 = vsub.s32 5, %v538
        %v540 = vrot.slane %v515, %v539
        %v541 = vlaneseq
        %v542 = vshrl.u32 %v541, 7
        %v543 = vsub.s32 6, %v542
        %v544 = vrot.slane %v515, %v543
        %v545 = vlaneseq
        %v546 = vshrl.u32 %v545, 7
        %v547 = vsub.s32 7, %v546
        %v548 = vrot.slane %v515, %v547
        %v559 = vunpack.c.l.b16 %v385
        %v560 = vunpack.c.l.b16 %v386
        %v561 = vpack.c.b16 %v560, %v559
        %v691 = vunpack.c.l.b16 %v387
        %v692 = vunpack.c.l.b16 %v388
        %v693 = vunpack.c.l.b16 %v389
        %v694 = vunpack.c.l.b16 %v390
        %v695 = vunpack.c.l.b16 %v391
        %v696 = vunpack.c.l.b16 %v392
        %v697 = vunpack.c.l.b16 %v393
        %v698 = vunpack.c.l.b16 %v394
        %v699 = vunpack.c.l.b16 %v395
        %v700 = vunpack.c.l.b16 %v396
        %v701 = vunpack.c.l.b16 %v397
        %v702 = vunpack.c.l.b16 %v398
        %v703 = vunpack.c.l.b16 %v399
        %v704 = vunpack.c.l.b16 %v400
        %v705 = vunpack.c.l.b16 %v401
        %v706 = vunpack.c.l.b16 %v402
        %v707 = vunpack.c.l.b16 %v403
        %v708 = vunpack.c.l.b16 %v404
        %v709 = vunpack.c.l.b16 %v405
        %v710 = vunpack.c.l.b16 %v406
        %v711 = vunpack.c.l.b16 %v407
        %v712 = vunpack.c.l.b16 %v408
        %v713 = vunpack.c.l.b16 %v409
        %v714 = vunpack.c.l.b16 %v410
        %v715 = vunpack.c.l.b16 %v411
        %v716 = vunpack.c.l.b16 %v412
        %v717 = vunpack.c.l.b16 %v413
        %v718 = vunpack.c.l.b16 %v414
        %v719 = vunpack.c.l.b16 %v415
        %v720 = vunpack.c.l.b16 %v416
        %v721 = vunpack.c.l.b16 %v417
        %v722 = vunpack.c.l.b16 %v418
        %v723 = vunpack.c.l.b16 %v419
        %v724 = vunpack.c.l.b16 %v420
        %v725 = vunpack.c.l.b16 %v421
        %v726 = vunpack.c.l.b16 %v422
        %v727 = vunpack.c.l.b16 %v423
        %v728 = vunpack.c.l.b16 %v424
        %v729 = vunpack.c.l.b16 %v425
        %v730 = vunpack.c.l.b16 %v426
        %v731 = vunpack.c.l.b16 %v427
        %v732 = vunpack.c.l.b16 %v428
        %v733 = vunpack.c.l.b16 %v429
        %v734 = vunpack.c.l.b16 %v430
        %v735 = vunpack.c.l.b16 %v431
        %v736 = vunpack.c.l.b16 %v432
        %v737 = vunpack.c.l.b16 %v433
        %v738 = vunpack.c.l.b16 %v434
        %v739 = vunpack.c.l.b16 %v435
        %v740 = vunpack.c.l.b16 %v436
        %v741 = vunpack.c.l.b16 %v437
        %v742 = vunpack.c.l.b16 %v438
        %v743 = vunpack.c.l.b16 %v439
        %v744 = vunpack.c.l.b16 %v440
        %v745 = vunpack.c.l.b16 %v441
        %v746 = vunpack.c.l.b16 %v442
        %v747 = vunpack.c.l.b16 %v443
        %v748 = vunpack.c.l.b16 %v444
        %v749 = vunpack.c.l.b16 %v445
        %v750 = vunpack.c.l.b16 %v446
        %v751 = vunpack.c.l.b16 %v447
        %v752 = vunpack.c.l.b16 %v448
        %v753 = vunpack.c.l.b16 %v449
        %v754 = vunpack.c.l.b16 %v450
        %v755 = vunpack.c.l.b16 %v451
        %v756 = vunpack.c.l.b16 %v452
        %v757 = vunpack.c.l.b16 %v453
        %v758 = vunpack.c.l.b16 %v454
        %v759 = vunpack.c.l.b16 %v455
        %v760 = vunpack.c.l.b16 %v456
        %v761 = vunpack.c.l.b16 %v457
        %v762 = vunpack.c.l.b16 %v458
        %v763 = vunpack.c.l.b16 %v459
        %v764 = vunpack.c.l.b16 %v460
        %v765 = vunpack.c.l.b16 %v461
        %v766 = vunpack.c.l.b16 %v462
        %v767 = vunpack.c.l.b16 %v463
        %v768 = vunpack.c.l.b16 %v464
        %v769 = vunpack.c.l.b16 %v465
        %v770 = vunpack.c.l.b16 %v466
        %v771 = vunpack.c.l.b16 %v467
        %v772 = vunpack.c.l.b16 %v468
        %v773 = vunpack.c.l.b16 %v469
        %v774 = vunpack.c.l.b16 %v470
        %v775 = vunpack.c.l.b16 %v471
        %v776 = vunpack.c.l.b16 %v472
        %v777 = vunpack.c.l.b16 %v473
        %v778 = vunpack.c.l.b16 %v474
        %v779 = vunpack.c.l.b16 %v475
        %v780 = vunpack.c.l.b16 %v476
        %v781 = vunpack.c.l.b16 %v477
        %v782 = vunpack.c.l.b16 %v478
        %v783 = vunpack.c.l.b16 %v479
        %v784 = vunpack.c.l.b16 %v480
        %v785 = vunpack.c.l.b16 %v481
        %v786 = vunpack.c.l.b16 %v482
        %v787 = vunpack.c.l.b16 %v483
        %v788 = vunpack.c.l.b16 %v484
        %v789 = vunpack.c.l.b16 %v485
        %v790 = vunpack.c.l.b16 %v486
        %v791 = vunpack.c.l.b16 %v487
        %v792 = vunpack.c.l.b16 %v488
        %v793 = vunpack.c.l.b16 %v489
        %v794 = vunpack.c.l.b16 %v490
        %v795 = vunpack.c.l.b16 %v491
        %v796 = vunpack.c.l.b16 %v492
        %v797 = vunpack.c.l.b16 %v493
        %v798 = vunpack.c.l.b16 %v494
        %v799 = vunpack.c.l.b16 %v495
        %v800 = vunpack.c.l.b16 %v496
        %v801 = vunpack.c.l.b16 %v497
        %v802 = vunpack.c.l.b16 %v498
        %v803 = vunpack.c.l.b16 %v499
        %v804 = vunpack.c.l.b16 %v500
        %v805 = vunpack.c.l.b16 %v501
        %v806 = vunpack.c.l.b16 %v502
        %v807 = vunpack.c.l.b16 %v503
        %v808 = vunpack.c.l.b16 %v504
        %v809 = vunpack.c.l.b16 %v505
        %v810 = vunpack.c.l.b16 %v506
        %v811 = vunpack.c.l.b16 %v507
        %v812 = vunpack.c.l.b16 %v508
        %v813 = vunpack.c.l.b16 %v509
        %v814 = vunpack.c.l.b16 %v510
        %v815 = vunpack.c.l.b16 %v511
        %v816 = vunpack.c.l.b16 %v512
        %v817 = vunpack.c.l.b16 %v513
        %v818 = vunpack.c.l.b16 %v514
        %v819 = vpack.c.b16 %v692, %v691
        %v820 = vpack.c.b16 %v694, %v693
        %v821 = vpack.c.b16 %v696, %v695
        %v822 = vpack.c.b16 %v698, %v697
        %v823 = vpack.c.b16 %v700, %v699
        %v824 = vpack.c.b16 %v702, %v701
        %v825 = vpack.c.b16 %v704, %v703
        %v826 = vpack.c.b16 %v706, %v705
        %v827 = vpack.c.b16 %v708, %v707
        %v828 = vpack.c.b16 %v710, %v709
        %v829 = vpack.c.b16 %v712, %v711
        %v830 = vpack.c.b16 %v714, %v713
        %v831 = vpack.c.b16 %v716, %v715
        %v832 = vpack.c.b16 %v718, %v717
        %v833 = vpack.c.b16 %v720, %v719
        %v834 = vpack.c.b16 %v722, %v721
        %v835 = vpack.c.b16 %v724, %v723
        %v836 = vpack.c.b16 %v726, %v725
        %v837 = vpack.c.b16 %v728, %v727
        %v838 = vpack.c.b16 %v730, %v729
        %v839 = vpack.c.b16 %v732, %v731
        %v840 = vpack.c.b16 %v734, %v733
        %v841 = vpack.c.b16 %v736, %v735
        %v842 = vpack.c.b16 %v738, %v737
        %v843 = vpack.c.b16 %v740, %v739
        %v844 = vpack.c.b16 %v742, %v741
        %v845 = vpack.c.b16 %v744, %v743
        %v846 = vpack.c.b16 %v746, %v745
        %v847 = vpack.c.b16 %v748, %v747
        %v848 = vpack.c.b16 %v750, %v749
        %v849 = vpack.c.b16 %v752, %v751
        %v850 = vpack.c.b16 %v754, %v753
        %v851 = vpack.c.b16 %v756, %v755
        %v852 = vpack.c.b16 %v758, %v757
        %v853 = vpack.c.b16 %v760, %v759
        %v854 = vpack.c.b16 %v762, %v761
        %v855 = vpack.c.b16 %v764, %v763
        %v856 = vpack.c.b16 %v766, %v765
        %v857 = vpack.c.b16 %v768, %v767
        %v858 = vpack.c.b16 %v770, %v769
        %v859 = vpack.c.b16 %v772, %v771
        %v860 = vpack.c.b16 %v774, %v773
        %v861 = vpack.c.b16 %v776, %v775
        %v862 = vpack.c.b16 %v778, %v777
        %v863 = vpack.c.b16 %v780, %v779
        %v864 = vpack.c.b16 %v782, %v781
        %v865 = vpack.c.b16 %v784, %v783
        %v866 = vpack.c.b16 %v786, %v785
        %v867 = vpack.c.b16 %v788, %v787
        %v868 = vpack.c.b16 %v790, %v789
        %v869 = vpack.c.b16 %v792, %v791
        %v870 = vpack.c.b16 %v794, %v793
        %v871 = vpack.c.b16 %v796, %v795
        %v872 = vpack.c.b16 %v798, %v797
        %v873 = vpack.c.b16 %v800, %v799
        %v874 = vpack.c.b16 %v802, %v801
        %v875 = vpack.c.b16 %v804, %v803
        %v876 = vpack.c.b16 %v806, %v805
        %v877 = vpack.c.b16 %v808, %v807
        %v878 = vpack.c.b16 %v810, %v809
        %v879 = vpack.c.b16 %v812, %v811
        %v880 = vpack.c.b16 %v814, %v813
        %v881 = vpack.c.b16 %v816, %v815
        %v882 = vpack.c.b16 %v818, %v817
        %947 = vmatprep.subr.bf16.mxu0 0
        %948 = vmatpush1.bf16.xpose.msra.mxu0 %v819
        %949 = vmatprep.subr.bf16.mxu0 0
        %950 = vmatpush1.bf16.xpose.msra.mxu0 %v820
        %951 = vmatprep.subr.bf16.mxu0 0
        %952 = vmatpush1.bf16.xpose.msra.mxu0 %v821
        %953 = vmatprep.subr.bf16.mxu0 0
        %954 = vmatpush1.bf16.xpose.msra.mxu0 %v822
        %955 = vmatprep.subr.bf16.mxu0 0
        %956 = vmatpush1.bf16.xpose.msra.mxu0 %v823
        %957 = vmatprep.subr.bf16.mxu0 0
        %958 = vmatpush1.bf16.xpose.msra.mxu0 %v824
        %959 = vmatprep.subr.bf16.mxu0 0
        %960 = vmatpush1.bf16.xpose.msra.mxu0 %v825
        %961 = vmatprep.subr.bf16.mxu0 0
        %962 = vmatpush1.bf16.xpose.msra.mxu0 %v826
        %963 = vmatprep.subr.bf16.mxu0 0
        %964 = vmatpush1.bf16.xpose.msra.mxu0 %v827
        %965 = vmatprep.subr.bf16.mxu0 0
        %966 = vmatpush1.bf16.xpose.msra.mxu0 %v828
        %967 = vmatprep.subr.bf16.mxu0 0
        %968 = vmatpush1.bf16.xpose.msra.mxu0 %v829
        %969 = vmatprep.subr.bf16.mxu0 0
        %970 = vmatpush1.bf16.xpose.msra.mxu0 %v830
        %971 = vmatprep.subr.bf16.mxu0 0
        %972 = vmatpush1.bf16.xpose.msra.mxu0 %v831
        %973 = vmatprep.subr.bf16.mxu0 0
        %974 = vmatpush1.bf16.xpose.msra.mxu0 %v832
        %975 = vmatprep.subr.bf16.mxu0 0
        %976 = vmatpush1.bf16.xpose.msra.mxu0 %v833
        %977 = vmatprep.subr.bf16.mxu0 0
        %978 = vmatpush1.bf16.xpose.msra.mxu0 %v834
        %979 = vmatprep.mubr.bf16.mxu0 0
        %980 = vmatmul.mubr.bf16.gmra.mrb[0].mxu0 %v561
        %v981 = vpop.f32.mrb[0].mxu0
        %v982 = vadd.f32 %v520, %v981
        %v983 = vpop.f32.mrb[0].mxu0
        %v984 = vadd.f32 %v524, %v983
        %v985 = vpop.f32.mrb[0].mxu0
        %v986 = vadd.f32 %v520, %v985
        %v987 = vpop.f32.mrb[0].mxu0
        %v988 = vadd.f32 %v524, %v987
        %989 = vdwg.mxu0
        %990 = vmatprep.subr.bf16.mxu0 0
        %991 = vmatpush1.bf16.xpose.msra.mxu0 %v835
        %992 = vmatprep.subr.bf16.mxu0 0
        %993 = vmatpush1.bf16.xpose.msra.mxu0 %v836
        %994 = vmatprep.subr.bf16.mxu0 0
        %995 = vmatpush1.bf16.xpose.msra.mxu0 %v837
        %996 = vmatprep.subr.bf16.mxu0 0
        %997 = vmatpush1.bf16.xpose.msra.mxu0 %v838
        %998 = vmatprep.subr.bf16.mxu0 0
        %999 = vmatpush1.bf16.xpose.msra.mxu0 %v839
        %1000 = vmatprep.subr.bf16.mxu0 0
        %1001 = vmatpush1.bf16.xpose.msra.mxu0 %v840
        %1002 = vmatprep.subr.bf16.mxu0 0
        %1003 = vmatpush1.bf16.xpose.msra.mxu0 %v841
        %1004 = vmatprep.subr.bf16.mxu0 0
        %1005 = vmatpush1.bf16.xpose.msra.mxu0 %v842
        %1006 = vmatprep.subr.bf16.mxu0 0
        %1007 = vmatpush1.bf16.xpose.msra.mxu0 %v843
        %1008 = vmatprep.subr.bf16.mxu0 0
        %1009 = vmatpush1.bf16.xpose.msra.mxu0 %v844
        %1010 = vmatprep.subr.bf16.mxu0 0
        %1011 = vmatpush1.bf16.xpose.msra.mxu0 %v845
        %1012 = vmatprep.subr.bf16.mxu0 0
        %1013 = vmatpush1.bf16.xpose.msra.mxu0 %v846
        %1014 = vmatprep.subr.bf16.mxu0 0
        %1015 = vmatpush1.bf16.xpose.msra.mxu0 %v847
        %1016 = vmatprep.subr.bf16.mxu0 0
        %1017 = vmatpush1.bf16.xpose.msra.mxu0 %v848
        %1018 = vmatprep.subr.bf16.mxu0 0
        %1019 = vmatpush1.bf16.xpose.msra.mxu0 %v849
        %1020 = vmatprep.subr.bf16.mxu0 0
        %1021 = vmatpush1.bf16.xpose.msra.mxu0 %v850
        %1022 = vmatprep.mubr.bf16.mxu0 0
        %1023 = vmatmul.mubr.bf16.gmra.mrb[0].mxu0 %v561
        %v1024 = vpop.f32.mrb[0].mxu0
        %v1025 = vadd.f32 %v528, %v1024
        %v1026 = vpop.f32.mrb[0].mxu0
        %v1027 = vadd.f32 %v532, %v1026
        %v1028 = vpop.f32.mrb[0].mxu0
        %v1029 = vadd.f32 %v528, %v1028
        %v1030 = vpop.f32.mrb[0].mxu0
        %v1031 = vadd.f32 %v532, %v1030
        %1032 = vdwg.mxu0
        %1033 = vmatprep.subr.bf16.mxu0 0
        %1034 = vmatpush1.bf16.xpose.msra.mxu0 %v851
        %1035 = vmatprep.subr.bf16.mxu0 0
        %1036 = vmatpush1.bf16.xpose.msra.mxu0 %v852
        %1037 = vmatprep.subr.bf16.mxu0 0
        %1038 = vmatpush1.bf16.xpose.msra.mxu0 %v853
        %1039 = vmatprep.subr.bf16.mxu0 0
        %1040 = vmatpush1.bf16.xpose.msra.mxu0 %v854
        %1041 = vmatprep.subr.bf16.mxu0 0
        %1042 = vmatpush1.bf16.xpose.msra.mxu0 %v855
        %1043 = vmatprep.subr.bf16.mxu0 0
        %1044 = vmatpush1.bf16.xpose.msra.mxu0 %v856
        %1045 = vmatprep.subr.bf16.mxu0 0
        %1046 = vmatpush1.bf16.xpose.msra.mxu0 %v857
        %1047 = vmatprep.subr.bf16.mxu0 0
        %1048 = vmatpush1.bf16.xpose.msra.mxu0 %v858
        %1049 = vmatprep.subr.bf16.mxu0 0
        %1050 = vmatpush1.bf16.xpose.msra.mxu0 %v859
        %1051 = vmatprep.subr.bf16.mxu0 0
        %1052 = vmatpush1.bf16.xpose.msra.mxu0 %v860
        %1053 = vmatprep.subr.bf16.mxu0 0
        %1054 = vmatpush1.bf16.xpose.msra.mxu0 %v861
        %1055 = vmatprep.subr.bf16.mxu0 0
        %1056 = vmatpush1.bf16.xpose.msra.mxu0 %v862
        %1057 = vmatprep.subr.bf16.mxu0 0
        %1058 = vmatpush1.bf16.xpose.msra.mxu0 %v863
        %1059 = vmatprep.subr.bf16.mxu0 0
        %1060 = vmatpush1.bf16.xpose.msra.mxu0 %v864
        %1061 = vmatprep.subr.bf16.mxu0 0
        %1062 = vmatpush1.bf16.xpose.msra.mxu0 %v865
        %1063 = vmatprep.subr.bf16.mxu0 0
        %1064 = vmatpush1.bf16.xpose.msra.mxu0 %v866
        %1065 = vmatprep.mubr.bf16.mxu0 0
        %1066 = vmatmul.mubr.bf16.gmra.mrb[0].mxu0 %v561
        %v1067 = vpop.f32.mrb[0].mxu0
        %v1068 = vadd.f32 %v536, %v1067
        %v1069 = vpop.f32.mrb[0].mxu0
        %v1070 = vadd.f32 %v540, %v1069
        %v1071 = vpop.f32.mrb[0].mxu0
        %v1072 = vadd.f32 %v536, %v1071
        %v1073 = vpop.f32.mrb[0].mxu0
        %v1074 = vadd.f32 %v540, %v1073
        %1075 = vdwg.mxu0
        %1076 = vmatprep.subr.bf16.mxu0 0
        %1077 = vmatpush1.bf16.xpose.msra.mxu0 %v867
        %1078 = vmatprep.subr.bf16.mxu0 0
        %1079 = vmatpush1.bf16.xpose.msra.mxu0 %v868
        %1080 = vmatprep.subr.bf16.mxu0 0
        %1081 = vmatpush1.bf16.xpose.msra.mxu0 %v869
        %1082 = vmatprep.subr.bf16.mxu0 0
        %1083 = vmatpush1.bf16.xpose.msra.mxu0 %v870
        %1084 = vmatprep.subr.bf16.mxu0 0
        %1085 = vmatpush1.bf16.xpose.msra.mxu0 %v871
        %1086 = vmatprep.subr.bf16.mxu0 0
        %1087 = vmatpush1.bf16.xpose.msra.mxu0 %v872
        %1088 = vmatprep.subr.bf16.mxu0 0
        %1089 = vmatpush1.bf16.xpose.msra.mxu0 %v873
        %1090 = vmatprep.subr.bf16.mxu0 0
        %1091 = vmatpush1.bf16.xpose.msra.mxu0 %v874
        %1092 = vmatprep.subr.bf16.mxu0 0
        %1093 = vmatpush1.bf16.xpose.msra.mxu0 %v875
        %1094 = vmatprep.subr.bf16.mxu0 0
        %1095 = vmatpush1.bf16.xpose.msra.mxu0 %v876
        %1096 = vmatprep.subr.bf16.mxu0 0
        %1097 = vmatpush1.bf16.xpose.msra.mxu0 %v877
        %1098 = vmatprep.subr.bf16.mxu0 0
        %1099 = vmatpush1.bf16.xpose.msra.mxu0 %v878
        %1100 = vmatprep.subr.bf16.mxu0 0
        %1101 = vmatpush1.bf16.xpose.msra.mxu0 %v879
        %1102 = vmatprep.subr.bf16.mxu0 0
        %1103 = vmatpush1.bf16.xpose.msra.mxu0 %v880
        %1104 = vmatprep.subr.bf16.mxu0 0
        %1105 = vmatpush1.bf16.xpose.msra.mxu0 %v881
        %1106 = vmatprep.subr.bf16.mxu0 0
        %1107 = vmatpush1.bf16.xpose.msra.mxu0 %v882
        %1108 = vmatprep.mubr.bf16.mxu0 0
        %1109 = vmatmul.mubr.bf16.gmra.mrb[0].mxu0 %v561
        %v1110 = vpop.f32.mrb[0].mxu0
        %v1111 = vadd.f32 %v544, %v1110
        %v1112 = vpop.f32.mrb[0].mxu0
        %v1113 = vadd.f32 %v548, %v1112
        %v1114 = vpop.f32.mrb[0].mxu0
        %v1115 = vadd.f32 %v544, %v1114
        %v1116 = vpop.f32.mrb[0].mxu0
        %v1117 = vadd.f32 %v548, %v1116
        %1118 = vdwg.mxu0
        %v1119 = vsub.f32 0.0, %v982
        %v1120 = vsub.f32 0.0, %v984
        %v1121 = vsub.f32 0.0, %v1025
        %v1122 = vsub.f32 0.0, %v1027
        %v1123 = vsub.f32 0.0, %v1068
        %v1124 = vsub.f32 0.0, %v1070
        %v1125 = vsub.f32 0.0, %v1111
        %v1126 = vsub.f32 0.0, %v1113
        %v1127 = vsub.f32 0.0, %v986
        %v1128 = vsub.f32 0.0, %v988
        %v1129 = vsub.f32 0.0, %v1029
        %v1130 = vsub.f32 0.0, %v1031
        %v1131 = vsub.f32 0.0, %v1072
        %v1132 = vsub.f32 0.0, %v1074
        %v1133 = vsub.f32 0.0, %v1115
        %v1134 = vsub.f32 0.0, %v1117
        %v1135 = vmul.f32 %v1119, 1.442695
        %v1136 = vpow.pop %v1135
        %v1137 = vmul.f32 %v1120, 1.442695
        %v1138 = vpow.pop %v1137
        %v1139 = vmul.f32 %v1121, 1.442695
        %v1140 = vpow.pop %v1139
        %v1141 = vmul.f32 %v1122, 1.442695
        %v1142 = vpow.pop %v1141
        %v1143 = vmul.f32 %v1123, 1.442695
        %v1144 = vpow.pop %v1143
        %v1145 = vmul.f32 %v1124, 1.442695
        %v1146 = vpow.pop %v1145
        %v1147 = vmul.f32 %v1125, 1.442695
        %v1148 = vpow.pop %v1147
        %v1149 = vmul.f32 %v1126, 1.442695
        %v1150 = vpow.pop %v1149
        %v1151 = vmul.f32 %v1127, 1.442695
        %v1152 = vpow.pop %v1151
        %v1153 = vmul.f32 %v1128, 1.442695
        %v1154 = vpow.pop %v1153
        %v1155 = vmul.f32 %v1129, 1.442695
        %v1156 = vpow.pop %v1155
        %v1157 = vmul.f32 %v1130, 1.442695
        %v1158 = vpow.pop %v1157
        %v1159 = vmul.f32 %v1131, 1.442695
        %v1160 = vpow.pop %v1159
        %v1161 = vmul.f32 %v1132, 1.442695
        %v1162 = vpow.pop %v1161
        %v1163 = vmul.f32 %v1133, 1.442695
        %v1164 = vpow.pop %v1163
        %v1165 = vmul.f32 %v1134, 1.442695
        %v1166 = vpow.pop %v1165
        %v1167 = vadd.f32 %v1136, 1.0
        %v1168 = vadd.f32 %v1138, 1.0
        %v1169 = vadd.f32 %v1140, 1.0
        %v1170 = vadd.f32 %v1142, 1.0
        %v1171 = vadd.f32 %v1144, 1.0
        %v1172 = vadd.f32 %v1146, 1.0
        %v1173 = vadd.f32 %v1148, 1.0
        %v1174 = vadd.f32 %v1150, 1.0
        %v1175 = vadd.f32 %v1152, 1.0
        %v1176 = vadd.f32 %v1154, 1.0
        %v1177 = vadd.f32 %v1156, 1.0
        %v1178 = vadd.f32 %v1158, 1.0
        %v1179 = vadd.f32 %v1160, 1.0
        %v1180 = vadd.f32 %v1162, 1.0
        %v1181 = vadd.f32 %v1164, 1.0
        %v1182 = vadd.f32 %v1166, 1.0
        %v1183 = vrcp.pop %v1167
        %v1184 = vrcp.pop %v1168
        %v1185 = vrcp.pop %v1169
        %v1186 = vrcp.pop %v1170
        %v1187 = vrcp.pop %v1171
        %v1188 = vrcp.pop %v1172
        %v1189 = vrcp.pop %v1173
        %v1190 = vrcp.pop %v1174
        %v1191 = vrcp.pop %v1175
        %v1192 = vrcp.pop %v1176
        %v1193 = vrcp.pop %v1177
        %v1194 = vrcp.pop %v1178
        %v1195 = vrcp.pop %v1179
        %v1196 = vrcp.pop %v1180
        %v1197 = vrcp.pop %v1181
        %v1198 = vrcp.pop %v1182
        %v1199 = vmul.f32 %v1183, 0.5
        %v1200 = vmul.f32 %v1184, 0.5
        %v1201 = vmul.f32 %v1185, 0.5
        %v1202 = vmul.f32 %v1186, 0.5
        %v1203 = vmul.f32 %v1187, 0.5
        %v1204 = vmul.f32 %v1188, 0.5
        %v1205 = vmul.f32 %v1189, 0.5
        %v1206 = vmul.f32 %v1190, 0.5
        %v1207 = vmul.f32 %v1191, 0.5
        %v1208 = vmul.f32 %v1192, 0.5
        %v1209 = vmul.f32 %v1193, 0.5
        %v1210 = vmul.f32 %v1194, 0.5
        %v1211 = vmul.f32 %v1195, 0.5
        %v1212 = vmul.f32 %v1196, 0.5
        %v1213 = vmul.f32 %v1197, 0.5
        %v1214 = vmul.f32 %v1198, 0.5
        %1215 = vst [vmem:[%s376] sm:$0xff] %v1199
        %1216 = vst [vmem:[%s376 + $0x8] sm:$0xff] %v1200
        %1217 = vst [vmem:[%s376 + $0x10] sm:$0xff] %v1201
        %1218 = vst [vmem:[%s376 + $0x18] sm:$0xff] %v1202
        %1219 = vst [vmem:[%s376 + $0x20] sm:$0xff] %v1203
        %1220 = vst [vmem:[%s376 + $0x28] sm:$0xff] %v1204
        %1221 = vst [vmem:[%s376 + $0x30] sm:$0xff] %v1205
        %1222 = vst [vmem:[%s376 + $0x38] sm:$0xff] %v1206
        %1223 = vst [vmem:[%s376 + $0x40] sm:$0xff] %v1207
        %1224 = vst [vmem:[%s376 + $0x48] sm:$0xff] %v1208
        %1225 = vst [vmem:[%s376 + $0x50] sm:$0xff] %v1209
        %1226 = vst [vmem:[%s376 + $0x58] sm:$0xff] %v1210
        %1227 = vst [vmem:[%s376 + $0x60] sm:$0xff] %v1211
        %1228 = vst [vmem:[%s376 + $0x68] sm:$0xff] %v1212
        %1229 = vst [vmem:[%s376 + $0x70] sm:$0xff] %v1213
        %1230 = vst [vmem:[%s376 + $0x78] sm:$0xff] %v1214
        %v1231 = vld [vmem:[#allocation8] sm:$0xff]
        %v1232 = vld [vmem:[#allocation8 + $0x8] sm:$0xff]
        %v1233 = vld [vmem:[%s340] sm:$0xff]
        %v1234 = vld [vmem:[%s340 + $0x8] sm:$0xff]
        %v1235 = vld [vmem:[%s340 + $0x10] sm:$0xff]
        %v1236 = vld [vmem:[%s340 + $0x18] sm:$0xff]
        %v1237 = vld [vmem:[%s340 + $0x20] sm:$0xff]
        %v1238 = vld [vmem:[%s340 + $0x28] sm:$0xff]
        %v1239 = vld [vmem:[%s340 + $0x30] sm:$0xff]
        %v1240 = vld [vmem:[%s340 + $0x38] sm:$0xff]
        %v1241 = vld [vmem:[%s340 + $0x40] sm:$0xff]
        %v1242 = vld [vmem:[%s340 + $0x48] sm:$0xff]
        %v1243 = vld [vmem:[%s340 + $0x50] sm:$0xff]
        %v1244 = vld [vmem:[%s340 + $0x58] sm:$0xff]
        %v1245 = vld [vmem:[%s340 + $0x60] sm:$0xff]
        %v1246 = vld [vmem:[%s340 + $0x68] sm:$0xff]
        %v1247 = vld [vmem:[%s340 + $0x70] sm:$0xff]
        %v1248 = vld [vmem:[%s340 + $0x78] sm:$0xff]
        %v1249 = vld [vmem:[%s340 + $0x80] sm:$0xff]
        %v1250 = vld [vmem:[%s340 + $0x88] sm:$0xff]
        %v1251 = vld [vmem:[%s340 + $0x90] sm:$0xff]
        %v1252 = vld [vmem:[%s340 + $0x98] sm:$0xff]
        %v1253 = vld [vmem:[%s340 + $0xa0] sm:$0xff]
        %v1254 = vld [vmem:[%s340 + $0xa8] sm:$0xff]
        %v1255 = vld [vmem:[%s340 + $0xb0] sm:$0xff]
        %v1256 = vld [vmem:[%s340 + $0xb8] sm:$0xff]
        %v1257 = vld [vmem:[%s340 + $0xc0] sm:$0xff]
        %v1258 = vld [vmem:[%s340 + $0xc8] sm:$0xff]
        %v1259 = vld [vmem:[%s340 + $0xd0] sm:$0xff]
        %v1260 = vld [vmem:[%s340 + $0xd8] sm:$0xff]
        %v1261 = vld [vmem:[%s340 + $0xe0] sm:$0xff]
        %v1262 = vld [vmem:[%s340 + $0xe8] sm:$0xff]
        %v1263 = vld [vmem:[%s340 + $0xf0] sm:$0xff]
        %v1264 = vld [vmem:[%s340 + $0xf8] sm:$0xff]
        %v1265 = vld [vmem:[%s340 + $0x100] sm:$0xff]
        %v1266 = vld [vmem:[%s340 + $0x108] sm:$0xff]
        %v1267 = vld [vmem:[%s340 + $0x110] sm:$0xff]
        %v1268 = vld [vmem:[%s340 + $0x118] sm:$0xff]
        %v1269 = vld [vmem:[%s340 + $0x120] sm:$0xff]
        %v1270 = vld [vmem:[%s340 + $0x128] sm:$0xff]
        %v1271 = vld [vmem:[%s340 + $0x130] sm:$0xff]
        %v1272 = vld [vmem:[%s340 + $0x138] sm:$0xff]
        %v1273 = vld [vmem:[%s340 + $0x140] sm:$0xff]
        %v1274 = vld [vmem:[%s340 + $0x148] sm:$0xff]
        %v1275 = vld [vmem:[%s340 + $0x150] sm:$0xff]
        %v1276 = vld [vmem:[%s340 + $0x158] sm:$0xff]
        %v1277 = vld [vmem:[%s340 + $0x160] sm:$0xff]
        %v1278 = vld [vmem:[%s340 + $0x168] sm:$0xff]
        %v1279 = vld [vmem:[%s340 + $0x170] sm:$0xff]
        %v1280 = vld [vmem:[%s340 + $0x178] sm:$0xff]
        %v1281 = vld [vmem:[%s340 + $0x180] sm:$0xff]
        %v1282 = vld [vmem:[%s340 + $0x188] sm:$0xff]
        %v1283 = vld [vmem:[%s340 + $0x190] sm:$0xff]
        %v1284 = vld [vmem:[%s340 + $0x198] sm:$0xff]
        %v1285 = vld [vmem:[%s340 + $0x1a0] sm:$0xff]
        %v1286 = vld [vmem:[%s340 + $0x1a8] sm:$0xff]
        %v1287 = vld [vmem:[%s340 + $0x1b0] sm:$0xff]
        %v1288 = vld [vmem:[%s340 + $0x1b8] sm:$0xff]
        %v1289 = vld [vmem:[%s340 + $0x1c0] sm:$0xff]
        %v1290 = vld [vmem:[%s340 + $0x1c8] sm:$0xff]
        %v1291 = vld [vmem:[%s340 + $0x1d0] sm:$0xff]
        %v1292 = vld [vmem:[%s340 + $0x1d8] sm:$0xff]
        %v1293 = vld [vmem:[%s340 + $0x1e0] sm:$0xff]
        %v1294 = vld [vmem:[%s340 + $0x1e8] sm:$0xff]
        %v1295 = vld [vmem:[%s340 + $0x1f0] sm:$0xff]
        %v1296 = vld [vmem:[%s340 + $0x1f8] sm:$0xff]
        %v1297 = vld [vmem:[%s340 + $0x200] sm:$0xff]
        %v1298 = vld [vmem:[%s340 + $0x208] sm:$0xff]
        %v1299 = vld [vmem:[%s340 + $0x210] sm:$0xff]
        %v1300 = vld [vmem:[%s340 + $0x218] sm:$0xff]
        %v1301 = vld [vmem:[%s340 + $0x220] sm:$0xff]
        %v1302 = vld [vmem:[%s340 + $0x228] sm:$0xff]
        %v1303 = vld [vmem:[%s340 + $0x230] sm:$0xff]
        %v1304 = vld [vmem:[%s340 + $0x238] sm:$0xff]
        %v1305 = vld [vmem:[%s340 + $0x240] sm:$0xff]
        %v1306 = vld [vmem:[%s340 + $0x248] sm:$0xff]
        %v1307 = vld [vmem:[%s340 + $0x250] sm:$0xff]
        %v1308 = vld [vmem:[%s340 + $0x258] sm:$0xff]
        %v1309 = vld [vmem:[%s340 + $0x260] sm:$0xff]
        %v1310 = vld [vmem:[%s340 + $0x268] sm:$0xff]
        %v1311 = vld [vmem:[%s340 + $0x270] sm:$0xff]
        %v1312 = vld [vmem:[%s340 + $0x278] sm:$0xff]
        %v1313 = vld [vmem:[%s340 + $0x280] sm:$0xff]
        %v1314 = vld [vmem:[%s340 + $0x288] sm:$0xff]
        %v1315 = vld [vmem:[%s340 + $0x290] sm:$0xff]
        %v1316 = vld [vmem:[%s340 + $0x298] sm:$0xff]
        %v1317 = vld [vmem:[%s340 + $0x2a0] sm:$0xff]
        %v1318 = vld [vmem:[%s340 + $0x2a8] sm:$0xff]
        %v1319 = vld [vmem:[%s340 + $0x2b0] sm:$0xff]
        %v1320 = vld [vmem:[%s340 + $0x2b8] sm:$0xff]
        %v1321 = vld [vmem:[%s340 + $0x2c0] sm:$0xff]
        %v1322 = vld [vmem:[%s340 + $0x2c8] sm:$0xff]
        %v1323 = vld [vmem:[%s340 + $0x2d0] sm:$0xff]
        %v1324 = vld [vmem:[%s340 + $0x2d8] sm:$0xff]
        %v1325 = vld [vmem:[%s340 + $0x2e0] sm:$0xff]
        %v1326 = vld [vmem:[%s340 + $0x2e8] sm:$0xff]
        %v1327 = vld [vmem:[%s340 + $0x2f0] sm:$0xff]
        %v1328 = vld [vmem:[%s340 + $0x2f8] sm:$0xff]
        %v1329 = vld [vmem:[%s340 + $0x300] sm:$0xff]
        %v1330 = vld [vmem:[%s340 + $0x308] sm:$0xff]
        %v1331 = vld [vmem:[%s340 + $0x310] sm:$0xff]
        %v1332 = vld [vmem:[%s340 + $0x318] sm:$0xff]
        %v1333 = vld [vmem:[%s340 + $0x320] sm:$0xff]
        %v1334 = vld [vmem:[%s340 + $0x328] sm:$0xff]
        %v1335 = vld [vmem:[%s340 + $0x330] sm:$0xff]
        %v1336 = vld [vmem:[%s340 + $0x338] sm:$0xff]
        %v1337 = vld [vmem:[%s340 + $0x340] sm:$0xff]
        %v1338 = vld [vmem:[%s340 + $0x348] sm:$0xff]
        %v1339 = vld [vmem:[%s340 + $0x350] sm:$0xff]
        %v1340 = vld [vmem:[%s340 + $0x358] sm:$0xff]
        %v1341 = vld [vmem:[%s340 + $0x360] sm:$0xff]
        %v1342 = vld [vmem:[%s340 + $0x368] sm:$0xff]
        %v1343 = vld [vmem:[%s340 + $0x370] sm:$0xff]
        %v1344 = vld [vmem:[%s340 + $0x378] sm:$0xff]
        %v1345 = vld [vmem:[%s340 + $0x380] sm:$0xff]
        %v1346 = vld [vmem:[%s340 + $0x388] sm:$0xff]
        %v1347 = vld [vmem:[%s340 + $0x390] sm:$0xff]
        %v1348 = vld [vmem:[%s340 + $0x398] sm:$0xff]
        %v1349 = vld [vmem:[%s340 + $0x3a0] sm:$0xff]
        %v1350 = vld [vmem:[%s340 + $0x3a8] sm:$0xff]
        %v1351 = vld [vmem:[%s340 + $0x3b0] sm:$0xff]
        %v1352 = vld [vmem:[%s340 + $0x3b8] sm:$0xff]
        %v1353 = vld [vmem:[%s340 + $0x3c0] sm:$0xff]
        %v1354 = vld [vmem:[%s340 + $0x3c8] sm:$0xff]
        %v1355 = vld [vmem:[%s340 + $0x3d0] sm:$0xff]
        %v1356 = vld [vmem:[%s340 + $0x3d8] sm:$0xff]
        %v1357 = vld [vmem:[%s340 + $0x3e0] sm:$0xff]
        %v1358 = vld [vmem:[%s340 + $0x3e8] sm:$0xff]
        %v1359 = vld [vmem:[%s340 + $0x3f0] sm:$0xff]
        %v1360 = vld [vmem:[%s340 + $0x3f8] sm:$0xff]
        %v1363 = vunpack.c.l.b16 %v1231
        %v1364 = vunpack.c.h.b16 %v1231
        %v1365 = vunpack.c.l.b16 %v1232
        %v1366 = vunpack.c.h.b16 %v1232
        %v1367 = vpack.c.b16 %v1365, %v1363
        %v1368 = vpack.c.b16 %v1366, %v1364
        %v1499 = vunpack.c.l.b16 %v1233
        %v1500 = vunpack.c.h.b16 %v1233
        %v1501 = vunpack.c.l.b16 %v1234
        %v1502 = vunpack.c.h.b16 %v1234
        %v1503 = vunpack.c.l.b16 %v1235
        %v1504 = vunpack.c.h.b16 %v1235
        %v1505 = vunpack.c.l.b16 %v1236
        %v1506 = vunpack.c.h.b16 %v1236
        %v1507 = vunpack.c.l.b16 %v1237
        %v1508 = vunpack.c.h.b16 %v1237
        %v1509 = vunpack.c.l.b16 %v1238
        %v1510 = vunpack.c.h.b16 %v1238
        %v1511 = vunpack.c.l.b16 %v1239
        %v1512 = vunpack.c.h.b16 %v1239
        %v1513 = vunpack.c.l.b16 %v1240
        %v1514 = vunpack.c.h.b16 %v1240
        %v1515 = vunpack.c.l.b16 %v1241
        %v1516 = vunpack.c.h.b16 %v1241
        %v1517 = vunpack.c.l.b16 %v1242
        %v1518 = vunpack.c.h.b16 %v1242
        %v1519 = vunpack.c.l.b16 %v1243
        %v1520 = vunpack.c.h.b16 %v1243
        %v1521 = vunpack.c.l.b16 %v1244
        %v1522 = vunpack.c.h.b16 %v1244
        %v1523 = vunpack.c.l.b16 %v1245
        %v1524 = vunpack.c.h.b16 %v1245
        %v1525 = vunpack.c.l.b16 %v1246
        %v1526 = vunpack.c.h.b16 %v1246
        %v1527 = vunpack.c.l.b16 %v1247
        %v1528 = vunpack.c.h.b16 %v1247
        %v1529 = vunpack.c.l.b16 %v1248
        %v1530 = vunpack.c.h.b16 %v1248
        %v1531 = vunpack.c.l.b16 %v1249
        %v1532 = vunpack.c.h.b16 %v1249
        %v1533 = vunpack.c.l.b16 %v1250
        %v1534 = vunpack.c.h.b16 %v1250
        %v1535 = vunpack.c.l.b16 %v1251
        %v1536 = vunpack.c.h.b16 %v1251
        %v1537 = vunpack.c.l.b16 %v1252
        %v1538 = vunpack.c.h.b16 %v1252
        %v1539 = vunpack.c.l.b16 %v1253
        %v1540 = vunpack.c.h.b16 %v1253
        %v1541 = vunpack.c.l.b16 %v1254
        %v1542 = vunpack.c.h.b16 %v1254
        %v1543 = vunpack.c.l.b16 %v1255
        %v1544 = vunpack.c.h.b16 %v1255
        %v1545 = vunpack.c.l.b16 %v1256
        %v1546 = vunpack.c.h.b16 %v1256
        %v1547 = vunpack.c.l.b16 %v1257
        %v1548 = vunpack.c.h.b16 %v1257
        %v1549 = vunpack.c.l.b16 %v1258
        %v1550 = vunpack.c.h.b16 %v1258
        %v1551 = vunpack.c.l.b16 %v1259
        %v1552 = vunpack.c.h.b16 %v1259
        %v1553 = vunpack.c.l.b16 %v1260
        %v1554 = vunpack.c.h.b16 %v1260
        %v1555 = vunpack.c.l.b16 %v1261
        %v1556 = vunpack.c.h.b16 %v1261
        %v1557 = vunpack.c.l.b16 %v1262
        %v1558 = vunpack.c.h.b16 %v1262
        %v1559 = vunpack.c.l.b16 %v1263
        %v1560 = vunpack.c.h.b16 %v1263
        %v1561 = vunpack.c.l.b16 %v1264
        %v1562 = vunpack.c.h.b16 %v1264
        %v1563 = vunpack.c.l.b16 %v1265
        %v1564 = vunpack.c.h.b16 %v1265
        %v1565 = vunpack.c.l.b16 %v1266
        %v1566 = vunpack.c.h.b16 %v1266
        %v1567 = vunpack.c.l.b16 %v1267
        %v1568 = vunpack.c.h.b16 %v1267
        %v1569 = vunpack.c.l.b16 %v1268
        %v1570 = vunpack.c.h.b16 %v1268
        %v1571 = vunpack.c.l.b16 %v1269
        %v1572 = vunpack.c.h.b16 %v1269
        %v1573 = vunpack.c.l.b16 %v1270
        %v1574 = vunpack.c.h.b16 %v1270
        %v1575 = vunpack.c.l.b16 %v1271
        %v1576 = vunpack.c.h.b16 %v1271
        %v1577 = vunpack.c.l.b16 %v1272
        %v1578 = vunpack.c.h.b16 %v1272
        %v1579 = vunpack.c.l.b16 %v1273
        %v1580 = vunpack.c.h.b16 %v1273
        %v1581 = vunpack.c.l.b16 %v1274
        %v1582 = vunpack.c.h.b16 %v1274
        %v1583 = vunpack.c.l.b16 %v1275
        %v1584 = vunpack.c.h.b16 %v1275
        %v1585 = vunpack.c.l.b16 %v1276
        %v1586 = vunpack.c.h.b16 %v1276
        %v1587 = vunpack.c.l.b16 %v1277
        %v1588 = vunpack.c.h.b16 %v1277
        %v1589 = vunpack.c.l.b16 %v1278
        %v1590 = vunpack.c.h.b16 %v1278
        %v1591 = vunpack.c.l.b16 %v1279
        %v1592 = vunpack.c.h.b16 %v1279
        %v1593 = vunpack.c.l.b16 %v1280
        %v1594 = vunpack.c.h.b16 %v1280
        %v1595 = vunpack.c.l.b16 %v1281
        %v1596 = vunpack.c.h.b16 %v1281
        %v1597 = vunpack.c.l.b16 %v1282
        %v1598 = vunpack.c.h.b16 %v1282
        %v1599 = vunpack.c.l.b16 %v1283
        %v1600 = vunpack.c.h.b16 %v1283
        %v1601 = vunpack.c.l.b16 %v1284
        %v1602 = vunpack.c.h.b16 %v1284
        %v1603 = vunpack.c.l.b16 %v1285
        %v1604 = vunpack.c.h.b16 %v1285
        %v1605 = vunpack.c.l.b16 %v1286
        %v1606 = vunpack.c.h.b16 %v1286
        %v1607 = vunpack.c.l.b16 %v1287
        %v1608 = vunpack.c.h.b16 %v1287
        %v1609 = vunpack.c.l.b16 %v1288
        %v1610 = vunpack.c.h.b16 %v1288
        %v1611 = vunpack.c.l.b16 %v1289
        %v1612 = vunpack.c.h.b16 %v1289
        %v1613 = vunpack.c.l.b16 %v1290
        %v1614 = vunpack.c.h.b16 %v1290
        %v1615 = vunpack.c.l.b16 %v1291
        %v1616 = vunpack.c.h.b16 %v1291
        %v1617 = vunpack.c.l.b16 %v1292
        %v1618 = vunpack.c.h.b16 %v1292
        %v1619 = vunpack.c.l.b16 %v1293
        %v1620 = vunpack.c.h.b16 %v1293
        %v1621 = vunpack.c.l.b16 %v1294
        %v1622 = vunpack.c.h.b16 %v1294
        %v1623 = vunpack.c.l.b16 %v1295
        %v1624 = vunpack.c.h.b16 %v1295
        %v1625 = vunpack.c.l.b16 %v1296
        %v1626 = vunpack.c.h.b16 %v1296
        %v1627 = vunpack.c.l.b16 %v1297
        %v1628 = vunpack.c.h.b16 %v1297
        %v1629 = vunpack.c.l.b16 %v1298
        %v1630 = vunpack.c.h.b16 %v1298
        %v1631 = vunpack.c.l.b16 %v1299
        %v1632 = vunpack.c.h.b16 %v1299
        %v1633 = vunpack.c.l.b16 %v1300
        %v1634 = vunpack.c.h.b16 %v1300
        %v1635 = vunpack.c.l.b16 %v1301
        %v1636 = vunpack.c.h.b16 %v1301
        %v1637 = vunpack.c.l.b16 %v1302
        %v1638 = vunpack.c.h.b16 %v1302
        %v1639 = vunpack.c.l.b16 %v1303
        %v1640 = vunpack.c.h.b16 %v1303
        %v1641 = vunpack.c.l.b16 %v1304
        %v1642 = vunpack.c.h.b16 %v1304
        %v1643 = vunpack.c.l.b16 %v1305
        %v1644 = vunpack.c.h.b16 %v1305
        %v1645 = vunpack.c.l.b16 %v1306
        %v1646 = vunpack.c.h.b16 %v1306
        %v1647 = vunpack.c.l.b16 %v1307
        %v1648 = vunpack.c.h.b16 %v1307
        %v1649 = vunpack.c.l.b16 %v1308
        %v1650 = vunpack.c.h.b16 %v1308
        %v1651 = vunpack.c.l.b16 %v1309
        %v1652 = vunpack.c.h.b16 %v1309
        %v1653 = vunpack.c.l.b16 %v1310
        %v1654 = vunpack.c.h.b16 %v1310
        %v1655 = vunpack.c.l.b16 %v1311
        %v1656 = vunpack.c.h.b16 %v1311
        %v1657 = vunpack.c.l.b16 %v1312
        %v1658 = vunpack.c.h.b16 %v1312
        %v1659 = vunpack.c.l.b16 %v1313
        %v1660 = vunpack.c.h.b16 %v1313
        %v1661 = vunpack.c.l.b16 %v1314
        %v1662 = vunpack.c.h.b16 %v1314
        %v1663 = vunpack.c.l.b16 %v1315
        %v1664 = vunpack.c.h.b16 %v1315
        %v1665 = vunpack.c.l.b16 %v1316
        %v1666 = vunpack.c.h.b16 %v1316
        %v1667 = vunpack.c.l.b16 %v1317
        %v1668 = vunpack.c.h.b16 %v1317
        %v1669 = vunpack.c.l.b16 %v1318
        %v1670 = vunpack.c.h.b16 %v1318
        %v1671 = vunpack.c.l.b16 %v1319
        %v1672 = vunpack.c.h.b16 %v1319
        %v1673 = vunpack.c.l.b16 %v1320
        %v1674 = vunpack.c.h.b16 %v1320
        %v1675 = vunpack.c.l.b16 %v1321
        %v1676 = vunpack.c.h.b16 %v1321
        %v1677 = vunpack.c.l.b16 %v1322
        %v1678 = vunpack.c.h.b16 %v1322
        %v1679 = vunpack.c.l.b16 %v1323
        %v1680 = vunpack.c.h.b16 %v1323
        %v1681 = vunpack.c.l.b16 %v1324
        %v1682 = vunpack.c.h.b16 %v1324
        %v1683 = vunpack.c.l.b16 %v1325
        %v1684 = vunpack.c.h.b16 %v1325
        %v1685 = vunpack.c.l.b16 %v1326
        %v1686 = vunpack.c.h.b16 %v1326
        %v1687 = vunpack.c.l.b16 %v1327
        %v1688 = vunpack.c.h.b16 %v1327
        %v1689 = vunpack.c.l.b16 %v1328
        %v1690 = vunpack.c.h.b16 %v1328
        %v1691 = vunpack.c.l.b16 %v1329
        %v1692 = vunpack.c.h.b16 %v1329
        %v1693 = vunpack.c.l.b16 %v1330
        %v1694 = vunpack.c.h.b16 %v1330
        %v1695 = vunpack.c.l.b16 %v1331
        %v1696 = vunpack.c.h.b16 %v1331
        %v1697 = vunpack.c.l.b16 %v1332
        %v1698 = vunpack.c.h.b16 %v1332
        %v1699 = vunpack.c.l.b16 %v1333
        %v1700 = vunpack.c.h.b16 %v1333
        %v1701 = vunpack.c.l.b16 %v1334
        %v1702 = vunpack.c.h.b16 %v1334
        %v1703 = vunpack.c.l.b16 %v1335
        %v1704 = vunpack.c.h.b16 %v1335
        %v1705 = vunpack.c.l.b16 %v1336
        %v1706 = vunpack.c.h.b16 %v1336
        %v1707 = vunpack.c.l.b16 %v1337
        %v1708 = vunpack.c.h.b16 %v1337
        %v1709 = vunpack.c.l.b16 %v1338
        %v1710 = vunpack.c.h.b16 %v1338
        %v1711 = vunpack.c.l.b16 %v1339
        %v1712 = vunpack.c.h.b16 %v1339
        %v1713 = vunpack.c.l.b16 %v1340
        %v1714 = vunpack.c.h.b16 %v1340
        %v1715 = vunpack.c.l.b16 %v1341
        %v1716 = vunpack.c.h.b16 %v1341
        %v1717 = vunpack.c.l.b16 %v1342
        %v1718 = vunpack.c.h.b16 %v1342
        %v1719 = vunpack.c.l.b16 %v1343
        %v1720 = vunpack.c.h.b16 %v1343
        %v1721 = vunpack.c.l.b16 %v1344
        %v1722 = vunpack.c.h.b16 %v1344
        %v1723 = vunpack.c.l.b16 %v1345
        %v1724 = vunpack.c.h.b16 %v1345
        %v1725 = vunpack.c.l.b16 %v1346
        %v1726 = vunpack.c.h.b16 %v1346
        %v1727 = vunpack.c.l.b16 %v1347
        %v1728 = vunpack.c.h.b16 %v1347
        %v1729 = vunpack.c.l.b16 %v1348
        %v1730 = vunpack.c.h.b16 %v1348
        %v1731 = vunpack.c.l.b16 %v1349
        %v1732 = vunpack.c.h.b16 %v1349
        %v1733 = vunpack.c.l.b16 %v1350
        %v1734 = vunpack.c.h.b16 %v1350
        %v1735 = vunpack.c.l.b16 %v1351
        %v1736 = vunpack.c.h.b16 %v1351
        %v1737 = vunpack.c.l.b16 %v1352
        %v1738 = vunpack.c.h.b16 %v1352
        %v1739 = vunpack.c.l.b16 %v1353
        %v1740 = vunpack.c.h.b16 %v1353
        %v1741 = vunpack.c.l.b16 %v1354
        %v1742 = vunpack.c.h.b16 %v1354
        %v1743 = vunpack.c.l.b16 %v1355
        %v1744 = vunpack.c.h.b16 %v1355
        %v1745 = vunpack.c.l.b16 %v1356
        %v1746 = vunpack.c.h.b16 %v1356
        %v1747 = vunpack.c.l.b16 %v1357
        %v1748 = vunpack.c.h.b16 %v1357
        %v1749 = vunpack.c.l.b16 %v1358
        %v1750 = vunpack.c.h.b16 %v1358
        %v1751 = vunpack.c.l.b16 %v1359
        %v1752 = vunpack.c.h.b16 %v1359
        %v1753 = vunpack.c.l.b16 %v1360
        %v1754 = vunpack.c.h.b16 %v1360
        %v1755 = vpack.c.b16 %v1501, %v1499
        %v1756 = vpack.c.b16 %v1502, %v1500
        %v1757 = vpack.c.b16 %v1505, %v1503
        %v1758 = vpack.c.b16 %v1506, %v1504
        %v1759 = vpack.c.b16 %v1509, %v1507
        %v1760 = vpack.c.b16 %v1510, %v1508
        %v1761 = vpack.c.b16 %v1513, %v1511
        %v1762 = vpack.c.b16 %v1514, %v1512
        %v1763 = vpack.c.b16 %v1517, %v1515
        %v1764 = vpack.c.b16 %v1518, %v1516
        %v1765 = vpack.c.b16 %v1521, %v1519
        %v1766 = vpack.c.b16 %v1522, %v1520
        %v1767 = vpack.c.b16 %v1525, %v1523
        %v1768 = vpack.c.b16 %v1526, %v1524
        %v1769 = vpack.c.b16 %v1529, %v1527
        %v1770 = vpack.c.b16 %v1530, %v1528
        %v1771 = vpack.c.b16 %v1533, %v1531
        %v1772 = vpack.c.b16 %v1534, %v1532
        %v1773 = vpack.c.b16 %v1537, %v1535
        %v1774 = vpack.c.b16 %v1538, %v1536
        %v1775 = vpack.c.b16 %v1541, %v1539
        %v1776 = vpack.c.b16 %v1542, %v1540
        %v1777 = vpack.c.b16 %v1545, %v1543
        %v1778 = vpack.c.b16 %v1546, %v1544
        %v1779 = vpack.c.b16 %v1549, %v1547
        %v1780 = vpack.c.b16 %v1550, %v1548
        %v1781 = vpack.c.b16 %v1553, %v1551
        %v1782 = vpack.c.b16 %v1554, %v1552
        %v1783 = vpack.c.b16 %v1557, %v1555
        %v1784 = vpack.c.b16 %v1558, %v1556
        %v1785 = vpack.c.b16 %v1561, %v1559
        %v1786 = vpack.c.b16 %v1562, %v1560
        %v1787 = vpack.c.b16 %v1565, %v1563
        %v1788 = vpack.c.b16 %v1566, %v1564
        %v1789 = vpack.c.b16 %v1569, %v1567
        %v1790 = vpack.c.b16 %v1570, %v1568
        %v1791 = vpack.c.b16 %v1573, %v1571
        %v1792 = vpack.c.b16 %v1574, %v1572
        %v1793 = vpack.c.b16 %v1577, %v1575
        %v1794 = vpack.c.b16 %v1578, %v1576
        %v1795 = vpack.c.b16 %v1581, %v1579
        %v1796 = vpack.c.b16 %v1582, %v1580
        %v1797 = vpack.c.b16 %v1585, %v1583
        %v1798 = vpack.c.b16 %v1586, %v1584
        %v1799 = vpack.c.b16 %v1589, %v1587
        %v1800 = vpack.c.b16 %v1590, %v1588
        %v1801 = vpack.c.b16 %v1593, %v1591
        %v1802 = vpack.c.b16 %v1594, %v1592
        %v1803 = vpack.c.b16 %v1597, %v1595
        %v1804 = vpack.c.b16 %v1598, %v1596
        %v1805 = vpack.c.b16 %v1601, %v1599
        %v1806 = vpack.c.b16 %v1602, %v1600
        %v1807 = vpack.c.b16 %v1605, %v1603
        %v1808 = vpack.c.b16 %v1606, %v1604
        %v1809 = vpack.c.b16 %v1609, %v1607
        %v1810 = vpack.c.b16 %v1610, %v1608
        %v1811 = vpack.c.b16 %v1613, %v1611
        %v1812 = vpack.c.b16 %v1614, %v1612
        %v1813 = vpack.c.b16 %v1617, %v1615
        %v1814 = vpack.c.b16 %v1618, %v1616
        %v1815 = vpack.c.b16 %v1621, %v1619
        %v1816 = vpack.c.b16 %v1622, %v1620
        %v1817 = vpack.c.b16 %v1625, %v1623
        %v1818 = vpack.c.b16 %v1626, %v1624
        %v1819 = vpack.c.b16 %v1629, %v1627
        %v1820 = vpack.c.b16 %v1630, %v1628
        %v1821 = vpack.c.b16 %v1633, %v1631
        %v1822 = vpack.c.b16 %v1634, %v1632
        %v1823 = vpack.c.b16 %v1637, %v1635
        %v1824 = vpack.c.b16 %v1638, %v1636
        %v1825 = vpack.c.b16 %v1641, %v1639
        %v1826 = vpack.c.b16 %v1642, %v1640
        %v1827 = vpack.c.b16 %v1645, %v1643
        %v1828 = vpack.c.b16 %v1646, %v1644
        %v1829 = vpack.c.b16 %v1649, %v1647
        %v1830 = vpack.c.b16 %v1650, %v1648
        %v1831 = vpack.c.b16 %v1653, %v1651
        %v1832 = vpack.c.b16 %v1654, %v1652
        %v1833 = vpack.c.b16 %v1657, %v1655
        %v1834 = vpack.c.b16 %v1658, %v1656
        %v1835 = vpack.c.b16 %v1661, %v1659
        %v1836 = vpack.c.b16 %v1662, %v1660
        %v1837 = vpack.c.b16 %v1665, %v1663
        %v1838 = vpack.c.b16 %v1666, %v1664
        %v1839 = vpack.c.b16 %v1669, %v1667
        %v1840 = vpack.c.b16 %v1670, %v1668
        %v1841 = vpack.c.b16 %v1673, %v1671
        %v1842 = vpack.c.b16 %v1674, %v1672
        %v1843 = vpack.c.b16 %v1677, %v1675
        %v1844 = vpack.c.b16 %v1678, %v1676
        %v1845 = vpack.c.b16 %v1681, %v1679
        %v1846 = vpack.c.b16 %v1682, %v1680
        %v1847 = vpack.c.b16 %v1685, %v1683
        %v1848 = vpack.c.b16 %v1686, %v1684
        %v1849 = vpack.c.b16 %v1689, %v1687
        %v1850 = vpack.c.b16 %v1690, %v1688
        %v1851 = vpack.c.b16 %v1693, %v1691
        %v1852 = vpack.c.b16 %v1694, %v1692
        %v1853 = vpack.c.b16 %v1697, %v1695
        %v1854 = vpack.c.b16 %v1698, %v1696
        %v1855 = vpack.c.b16 %v1701, %v1699
        %v1856 = vpack.c.b16 %v1702, %v1700
        %v1857 = vpack.c.b16 %v1705, %v1703
        %v1858 = vpack.c.b16 %v1706, %v1704
        %v1859 = vpack.c.b16 %v1709, %v1707
        %v1860 = vpack.c.b16 %v1710, %v1708
        %v1861 = vpack.c.b16 %v1713, %v1711
        %v1862 = vpack.c.b16 %v1714, %v1712
        %v1863 = vpack.c.b16 %v1717, %v1715
        %v1864 = vpack.c.b16 %v1718, %v1716
        %v1865 = vpack.c.b16 %v1721, %v1719
        %v1866 = vpack.c.b16 %v1722, %v1720
        %v1867 = vpack.c.b16 %v1725, %v1723
        %v1868 = vpack.c.b16 %v1726, %v1724
        %v1869 = vpack.c.b16 %v1729, %v1727
        %v1870 = vpack.c.b16 %v1730, %v1728
        %v1871 = vpack.c.b16 %v1733, %v1731
        %v1872 = vpack.c.b16 %v1734, %v1732
        %v1873 = vpack.c.b16 %v1737, %v1735
        %v1874 = vpack.c.b16 %v1738, %v1736
        %v1875 = vpack.c.b16 %v1741, %v1739
        %v1876 = vpack.c.b16 %v1742, %v1740
        %v1877 = vpack.c.b16 %v1745, %v1743
        %v1878 = vpack.c.b16 %v1746, %v1744
        %v1879 = vpack.c.b16 %v1749, %v1747
        %v1880 = vpack.c.b16 %v1750, %v1748
        %v1881 = vpack.c.b16 %v1753, %v1751
        %v1882 = vpack.c.b16 %v1754, %v1752
        %2011 = vmatprep.subr.bf16.mxu0 %v1756
        %2012 = vmatpush1.bf16.xpose.msra.mxu0 %v1755
        %2013 = vmatprep.subr.bf16.mxu0 %v1758
        %2014 = vmatpush1.bf16.xpose.msra.mxu0 %v1757
        %2015 = vmatprep.subr.bf16.mxu0 %v1760
        %2016 = vmatpush1.bf16.xpose.msra.mxu0 %v1759
        %2017 = vmatprep.subr.bf16.mxu0 %v1762
        %2018 = vmatpush1.bf16.xpose.msra.mxu0 %v1761
        %2019 = vmatprep.subr.bf16.mxu0 %v1764
        %2020 = vmatpush1.bf16.xpose.msra.mxu0 %v1763
        %2021 = vmatprep.subr.bf16.mxu0 %v1766
        %2022 = vmatpush1.bf16.xpose.msra.mxu0 %v1765
        %2023 = vmatprep.subr.bf16.mxu0 %v1768
        %2024 = vmatpush1.bf16.xpose.msra.mxu0 %v1767
        %2025 = vmatprep.subr.bf16.mxu0 %v1770
        %2026 = vmatpush1.bf16.xpose.msra.mxu0 %v1769
        %2027 = vmatprep.subr.bf16.mxu0 %v1772
        %2028 = vmatpush1.bf16.xpose.msra.mxu0 %v1771
        %2029 = vmatprep.subr.bf16.mxu0 %v1774
        %2030 = vmatpush1.bf16.xpose.msra.mxu0 %v1773
        %2031 = vmatprep.subr.bf16.mxu0 %v1776
        %2032 = vmatpush1.bf16.xpose.msra.mxu0 %v1775
        %2033 = vmatprep.subr.bf16.mxu0 %v1778
        %2034 = vmatpush1.bf16.xpose.msra.mxu0 %v1777
        %2035 = vmatprep.subr.bf16.mxu0 %v1780
        %2036 = vmatpush1.bf16.xpose.msra.mxu0 %v1779
        %2037 = vmatprep.subr.bf16.mxu0 %v1782
        %2038 = vmatpush1.bf16.xpose.msra.mxu0 %v1781
        %2039 = vmatprep.subr.bf16.mxu0 %v1784
        %2040 = vmatpush1.bf16.xpose.msra.mxu0 %v1783
        %2041 = vmatprep.subr.bf16.mxu0 %v1786
        %2042 = vmatpush1.bf16.xpose.msra.mxu0 %v1785
        %2043 = vmatprep.mubr.bf16.mxu0 %v1368
        %2044 = vmatmul.mubr.bf16.gmra.mrb[0].mxu0 %v1367
        %v2045 = vpop.f32.mrb[0].mxu0
        %v2046 = vadd.f32 0.0, %v2045
        %v2047 = vpop.f32.mrb[0].mxu0
        %v2048 = vadd.f32 0.0, %v2047
        %v2049 = vpop.f32.mrb[0].mxu0
        %v2050 = vadd.f32 0.0, %v2049
        %v2051 = vpop.f32.mrb[0].mxu0
        %v2052 = vadd.f32 0.0, %v2051
        %2053 = vdwg.mxu0
        %2054 = vmatprep.subr.bf16.mxu0 %v1788
        %2055 = vmatpush1.bf16.xpose.msra.mxu0 %v1787
        %2056 = vmatprep.subr.bf16.mxu0 %v1790
        %2057 = vmatpush1.bf16.xpose.msra.mxu0 %v1789
        %2058 = vmatprep.subr.bf16.mxu0 %v1792
        %2059 = vmatpush1.bf16.xpose.msra.mxu0 %v1791
        %2060 = vmatprep.subr.bf16.mxu0 %v1794
        %2061 = vmatpush1.bf16.xpose.msra.mxu0 %v1793
        %2062 = vmatprep.subr.bf16.mxu0 %v1796
        %2063 = vmatpush1.bf16.xpose.msra.mxu0 %v1795
        %2064 = vmatprep.subr.bf16.mxu0 %v1798
        %2065 = vmatpush1.bf16.xpose.msra.mxu0 %v1797
        %2066 = vmatprep.subr.bf16.mxu0 %v1800
        %2067 = vmatpush1.bf16.xpose.msra.mxu0 %v1799
        %2068 = vmatprep.subr.bf16.mxu0 %v1802
        %2069 = vmatpush1.bf16.xpose.msra.mxu0 %v1801
        %2070 = vmatprep.subr.bf16.mxu0 %v1804
        %2071 = vmatpush1.bf16.xpose.msra.mxu0 %v1803
        %2072 = vmatprep.subr.bf16.mxu0 %v1806
        %2073 = vmatpush1.bf16.xpose.msra.mxu0 %v1805
        %2074 = vmatprep.subr.bf16.mxu0 %v1808
        %2075 = vmatpush1.bf16.xpose.msra.mxu0 %v1807
        %2076 = vmatprep.subr.bf16.mxu0 %v1810
        %2077 = vmatpush1.bf16.xpose.msra.mxu0 %v1809
        %2078 = vmatprep.subr.bf16.mxu0 %v1812
        %2079 = vmatpush1.bf16.xpose.msra.mxu0 %v1811
        %2080 = vmatprep.subr.bf16.mxu0 %v1814
        %2081 = vmatpush1.bf16.xpose.msra.mxu0 %v1813
        %2082 = vmatprep.subr.bf16.mxu0 %v1816
        %2083 = vmatpush1.bf16.xpose.msra.mxu0 %v1815
        %2084 = vmatprep.subr.bf16.mxu0 %v1818
        %2085 = vmatpush1.bf16.xpose.msra.mxu0 %v1817
        %2086 = vmatprep.mubr.bf16.mxu0 %v1368
        %2087 = vmatmul.mubr.bf16.gmra.mrb[0].mxu0 %v1367
        %v2088 = vpop.f32.mrb[0].mxu0
        %v2089 = vadd.f32 0.0, %v2088
        %v2090 = vpop.f32.mrb[0].mxu0
        %v2091 = vadd.f32 0.0, %v2090
        %v2092 = vpop.f32.mrb[0].mxu0
        %v2093 = vadd.f32 0.0, %v2092
        %v2094 = vpop.f32.mrb[0].mxu0
        %v2095 = vadd.f32 0.0, %v2094
        %2096 = vdwg.mxu0
        %2097 = vmatprep.subr.bf16.mxu0 %v1820
        %2098 = vmatpush1.bf16.xpose.msra.mxu0 %v1819
        %2099 = vmatprep.subr.bf16.mxu0 %v1822
        %2100 = vmatpush1.bf16.xpose.msra.mxu0 %v1821
        %2101 = vmatprep.subr.bf16.mxu0 %v1824
        %2102 = vmatpush1.bf16.xpose.msra.mxu0 %v1823
        %2103 = vmatprep.subr.bf16.mxu0 %v1826
        %2104 = vmatpush1.bf16.xpose.msra.mxu0 %v1825
        %2105 = vmatprep.subr.bf16.mxu0 %v1828
        %2106 = vmatpush1.bf16.xpose.msra.mxu0 %v1827
        %2107 = vmatprep.subr.bf16.mxu0 %v1830
        %2108 = vmatpush1.bf16.xpose.msra.mxu0 %v1829
        %2109 = vmatprep.subr.bf16.mxu0 %v1832
        %2110 = vmatpush1.bf16.xpose.msra.mxu0 %v1831
        %2111 = vmatprep.subr.bf16.mxu0 %v1834
        %2112 = vmatpush1.bf16.xpose.msra.mxu0 %v1833
        %2113 = vmatprep.subr.bf16.mxu0 %v1836
        %2114 = vmatpush1.bf16.xpose.msra.mxu0 %v1835
        %2115 = vmatprep.subr.bf16.mxu0 %v1838
        %2116 = vmatpush1.bf16.xpose.msra.mxu0 %v1837
        %2117 = vmatprep.subr.bf16.mxu0 %v1840
        %2118 = vmatpush1.bf16.xpose.msra.mxu0 %v1839
        %2119 = vmatprep.subr.bf16.mxu0 %v1842
        %2120 = vmatpush1.bf16.xpose.msra.mxu0 %v1841
        %2121 = vmatprep.subr.bf16.mxu0 %v1844
        %2122 = vmatpush1.bf16.xpose.msra.mxu0 %v1843
        %2123 = vmatprep.subr.bf16.mxu0 %v1846
        %2124 = vmatpush1.bf16.xpose.msra.mxu0 %v1845
        %2125 = vmatprep.subr.bf16.mxu0 %v1848
        %2126 = vmatpush1.bf16.xpose.msra.mxu0 %v1847
        %2127 = vmatprep.subr.bf16.mxu0 %v1850
        %2128 = vmatpush1.bf16.xpose.msra.mxu0 %v1849
        %2129 = vmatprep.mubr.bf16.mxu0 %v1368
        %2130 = vmatmul.mubr.bf16.gmra.mrb[0].mxu0 %v1367
        %v2131 = vpop.f32.mrb[0].mxu0
        %v2132 = vadd.f32 0.0, %v2131
        %v2133 = vpop.f32.mrb[0].mxu0
        %v2134 = vadd.f32 0.0, %v2133
        %v2135 = vpop.f32.mrb[0].mxu0
        %v2136 = vadd.f32 0.0, %v2135
        %v2137 = vpop.f32.mrb[0].mxu0
        %v2138 = vadd.f32 0.0, %v2137
        %2139 = vdwg.mxu0
        %2140 = vmatprep.subr.bf16.mxu0 %v1852
        %2141 = vmatpush1.bf16.xpose.msra.mxu0 %v1851
        %2142 = vmatprep.subr.bf16.mxu0 %v1854
        %2143 = vmatpush1.bf16.xpose.msra.mxu0 %v1853
        %2144 = vmatprep.subr.bf16.mxu0 %v1856
        %2145 = vmatpush1.bf16.xpose.msra.mxu0 %v1855
        %2146 = vmatprep.subr.bf16.mxu0 %v1858
        %2147 = vmatpush1.bf16.xpose.msra.mxu0 %v1857
        %2148 = vmatprep.subr.bf16.mxu0 %v1860
        %2149 = vmatpush1.bf16.xpose.msra.mxu0 %v1859
        %2150 = vmatprep.subr.bf16.mxu0 %v1862
        %2151 = vmatpush1.bf16.xpose.msra.mxu0 %v1861
        %2152 = vmatprep.subr.bf16.mxu0 %v1864
        %2153 = vmatpush1.bf16.xpose.msra.mxu0 %v1863
        %2154 = vmatprep.subr.bf16.mxu0 %v1866
        %2155 = vmatpush1.bf16.xpose.msra.mxu0 %v1865
        %2156 = vmatprep.subr.bf16.mxu0 %v1868
        %2157 = vmatpush1.bf16.xpose.msra.mxu0 %v1867
        %2158 = vmatprep.subr.bf16.mxu0 %v1870
        %2159 = vmatpush1.bf16.xpose.msra.mxu0 %v1869
        %2160 = vmatprep.subr.bf16.mxu0 %v1872
        %2161 = vmatpush1.bf16.xpose.msra.mxu0 %v1871
        %2162 = vmatprep.subr.bf16.mxu0 %v1874
        %2163 = vmatpush1.bf16.xpose.msra.mxu0 %v1873
        %2164 = vmatprep.subr.bf16.mxu0 %v1876
        %2165 = vmatpush1.bf16.xpose.msra.mxu0 %v1875
        %2166 = vmatprep.subr.bf16.mxu0 %v1878
        %2167 = vmatpush1.bf16.xpose.msra.mxu0 %v1877
        %2168 = vmatprep.subr.bf16.mxu0 %v1880
        %2169 = vmatpush1.bf16.xpose.msra.mxu0 %v1879
        %2170 = vmatprep.subr.bf16.mxu0 %v1882
        %2171 = vmatpush1.bf16.xpose.msra.mxu0 %v1881
        %2172 = vmatprep.mubr.bf16.mxu0 %v1368
        %2173 = vmatmul.mubr.bf16.gmra.mrb[0].mxu0 %v1367
        %v2174 = vpop.f32.mrb[0].mxu0
        %v2175 = vadd.f32 0.0, %v2174
        %v2176 = vpop.f32.mrb[0].mxu0
        %v2177 = vadd.f32 0.0, %v2176
        %v2178 = vpop.f32.mrb[0].mxu0
        %v2179 = vadd.f32 0.0, %v2178
        %v2180 = vpop.f32.mrb[0].mxu0
        %v2181 = vadd.f32 0.0, %v2180
        %2182 = vdwg.mxu0
        %v2183 = vld [vmem:[%s376] sm:$0xff]
        %v2184 = vld [vmem:[%s376 + $0x8] sm:$0xff]
        %v2185 = vld [vmem:[%s376 + $0x10] sm:$0xff]
        %v2186 = vld [vmem:[%s376 + $0x18] sm:$0xff]
        %v2187 = vld [vmem:[%s376 + $0x20] sm:$0xff]
        %v2188 = vld [vmem:[%s376 + $0x28] sm:$0xff]
        %v2189 = vld [vmem:[%s376 + $0x30] sm:$0xff]
        %v2190 = vld [vmem:[%s376 + $0x38] sm:$0xff]
        %v2191 = vld [vmem:[%s376 + $0x40] sm:$0xff]
        %v2192 = vld [vmem:[%s376 + $0x48] sm:$0xff]
        %v2193 = vld [vmem:[%s376 + $0x50] sm:$0xff]
        %v2194 = vld [vmem:[%s376 + $0x58] sm:$0xff]
        %v2195 = vld [vmem:[%s376 + $0x60] sm:$0xff]
        %v2196 = vld [vmem:[%s376 + $0x68] sm:$0xff]
        %v2197 = vld [vmem:[%s376 + $0x70] sm:$0xff]
        %v2198 = vld [vmem:[%s376 + $0x78] sm:$0xff]
        %v2199 = vsub.f32 0.0, %v2046
        %v2200 = vsub.f32 0.0, %v2048
        %v2201 = vsub.f32 0.0, %v2089
        %v2202 = vsub.f32 0.0, %v2091
        %v2203 = vsub.f32 0.0, %v2132
        %v2204 = vsub.f32 0.0, %v2134
        %v2205 = vsub.f32 0.0, %v2175
        %v2206 = vsub.f32 0.0, %v2177
        %v2207 = vsub.f32 0.0, %v2050
        %v2208 = vsub.f32 0.0, %v2052
        %v2209 = vsub.f32 0.0, %v2093
        %v2210 = vsub.f32 0.0, %v2095
        %v2211 = vsub.f32 0.0, %v2136
        %v2212 = vsub.f32 0.0, %v2138
        %v2213 = vsub.f32 0.0, %v2179
        %v2214 = vsub.f32 0.0, %v2181
        %v2215 = vmul.f32 %v2199, 1.442695
        %v2216 = vpow.pop %v2215
        %v2217 = vmul.f32 %v2200, 1.442695
        %v2218 = vpow.pop %v2217
        %v2219 = vmul.f32 %v2201, 1.442695
        %v2220 = vpow.pop %v2219
        %v2221 = vmul.f32 %v2202, 1.442695
        %v2222 = vpow.pop %v2221
        %v2223 = vmul.f32 %v2203, 1.442695
        %v2224 = vpow.pop %v2223
        %v2225 = vmul.f32 %v2204, 1.442695
        %v2226 = vpow.pop %v2225
        %v2227 = vmul.f32 %v2205, 1.442695
        %v2228 = vpow.pop %v2227
        %v2229 = vmul.f32 %v2206, 1.442695
        %v2230 = vpow.pop %v2229
        %v2231 = vmul.f32 %v2207, 1.442695
        %v2232 = vpow.pop %v2231
        %v2233 = vmul.f32 %v2208, 1.442695
        %v2234 = vpow.pop %v2233
        %v2235 = vmul.f32 %v2209, 1.442695
        %v2236 = vpow.pop %v2235
        %v2237 = vmul.f32 %v2210, 1.442695
        %v2238 = vpow.pop %v2237
        %v2239 = vmul.f32 %v2211, 1.442695
        %v2240 = vpow.pop %v2239
        %v2241 = vmul.f32 %v2212, 1.442695
        %v2242 = vpow.pop %v2241
        %v2243 = vmul.f32 %v2213, 1.442695
        %v2244 = vpow.pop %v2243
        %v2245 = vmul.f32 %v2214, 1.442695
        %v2246 = vpow.pop %v2245
        %v2247 = vadd.f32 %v2216, 1.0
        %v2248 = vadd.f32 %v2218, 1.0
        %v2249 = vadd.f32 %v2220, 1.0
        %v2250 = vadd.f32 %v2222, 1.0
        %v2251 = vadd.f32 %v2224, 1.0
        %v2252 = vadd.f32 %v2226, 1.0
        %v2253 = vadd.f32 %v2228, 1.0
        %v2254 = vadd.f32 %v2230, 1.0
        %v2255 = vadd.f32 %v2232, 1.0
        %v2256 = vadd.f32 %v2234, 1.0
        %v2257 = vadd.f32 %v2236, 1.0
        %v2258 = vadd.f32 %v2238, 1.0
        %v2259 = vadd.f32 %v2240, 1.0
        %v2260 = vadd.f32 %v2242, 1.0
        %v2261 = vadd.f32 %v2244, 1.0
        %v2262 = vadd.f32 %v2246, 1.0
        %v2263 = vrcp.pop %v2247
        %v2264 = vrcp.pop %v2248
        %v2265 = vrcp.pop %v2249
        %v2266 = vrcp.pop %v2250
        %v2267 = vrcp.pop %v2251
        %v2268 = vrcp.pop %v2252
        %v2269 = vrcp.pop %v2253
        %v2270 = vrcp.pop %v2254
        %v2271 = vrcp.pop %v2255
        %v2272 = vrcp.pop %v2256
        %v2273 = vrcp.pop %v2257
        %v2274 = vrcp.pop %v2258
        %v2275 = vrcp.pop %v2259
        %v2276 = vrcp.pop %v2260
        %v2277 = vrcp.pop %v2261
        %v2278 = vrcp.pop %v2262
        %v2279 = vmul.f32 %v2263, 0.5
        %v2280 = vmul.f32 %v2264, 0.5
        %v2281 = vmul.f32 %v2265, 0.5
        %v2282 = vmul.f32 %v2266, 0.5
        %v2283 = vmul.f32 %v2267, 0.5
        %v2284 = vmul.f32 %v2268, 0.5
        %v2285 = vmul.f32 %v2269, 0.5
        %v2286 = vmul.f32 %v2270, 0.5
        %v2287 = vmul.f32 %v2271, 0.5
        %v2288 = vmul.f32 %v2272, 0.5
        %v2289 = vmul.f32 %v2273, 0.5
        %v2290 = vmul.f32 %v2274, 0.5
        %v2291 = vmul.f32 %v2275, 0.5
        %v2292 = vmul.f32 %v2276, 0.5
        %v2293 = vmul.f32 %v2277, 0.5
        %v2294 = vmul.f32 %v2278, 0.5
        %v2295 = vadd.f32 %v2183, %v2279
        %v2296 = vadd.f32 %v2184, %v2280
        %v2297 = vadd.f32 %v2185, %v2281
        %v2298 = vadd.f32 %v2186, %v2282
        %v2299 = vadd.f32 %v2187, %v2283
        %v2300 = vadd.f32 %v2188, %v2284
        %v2301 = vadd.f32 %v2189, %v2285
        %v2302 = vadd.f32 %v2190, %v2286
        %v2303 = vadd.f32 %v2191, %v2287
        %v2304 = vadd.f32 %v2192, %v2288
        %v2305 = vadd.f32 %v2193, %v2289
        %v2306 = vadd.f32 %v2194, %v2290
        %v2307 = vadd.f32 %v2195, %v2291
        %v2308 = vadd.f32 %v2196, %v2292
        %v2309 = vadd.f32 %v2197, %v2293
        %v2310 = vadd.f32 %v2198, %v2294
        %2311 = vst [vmem:[%s376] sm:$0xff] %v2295
        %2312 = vst [vmem:[%s376 + $0x8] sm:$0xff] %v2296
        %2313 = vst [vmem:[%s376 + $0x10] sm:$0xff] %v2297
        %2314 = vst [vmem:[%s376 + $0x18] sm:$0xff] %v2298
        %2315 = vst [vmem:[%s376 + $0x20] sm:$0xff] %v2299
        %2316 = vst [vmem:[%s376 + $0x28] sm:$0xff] %v2300
        %2317 = vst [vmem:[%s376 + $0x30] sm:$0xff] %v2301
        %2318 = vst [vmem:[%s376 + $0x38] sm:$0xff] %v2302
        %2319 = vst [vmem:[%s376 + $0x40] sm:$0xff] %v2303
        %2320 = vst [vmem:[%s376 + $0x48] sm:$0xff] %v2304
        %2321 = vst [vmem:[%s376 + $0x50] sm:$0xff] %v2305
        %2322 = vst [vmem:[%s376 + $0x58] sm:$0xff] %v2306
        %2323 = vst [vmem:[%s376 + $0x60] sm:$0xff] %v2307
        %2324 = vst [vmem:[%s376 + $0x68] sm:$0xff] %v2308
        %2325 = vst [vmem:[%s376 + $0x70] sm:$0xff] %v2309
        %2326 = vst [vmem:[%s376 + $0x78] sm:$0xff] %v2310
        %s2327 = sand.u32 %s176, 1
        %s2328 = scalar_lea.sflag [#allocation4], %s2327
        %s2329 = sand.u32 %s176, 1
        %s2330 = smul.addr %s2329, 128
        %s2331 = scalar_lea.vmem [#allocation11], %s2330
        // Predicated region
        $region61: #{tpu_custom_call.1} parent=39 // pred_check
          %p2332 = pneg %p186
        $region62: #{tpu_custom_call.1} parent=39 // pred_check_branch
          %2334 = sbr.rel (%p2332) target = $region64
        $region63: #{tpu_custom_call.1} parent=39 // pred_region
          %s2335 = smul.u32 2, %s29
          %s2336 = smul.u32 8, %s28
          %s2338 = ssub.s32 2048, 2048
          %2339 = vsyncadd %s2328, %s2338
          %s2340 = smul.addr %s2335, 16
          %s2341 = sadd.s32 %s2336, %s2340
          %s2342 = smul.addr %s2341, 128
          %s2343 = scalar_lea.hbm %s5, %s2342
          %s2344 = sshll.u32 %s2331, 4
          %s2345 = int_to_ptr.vmem [resolvable:$true] %s2344
          %2350 = dma.vmem_to_hbm [thread:$0]  %s2345, 2048, %s2343, %s2328, 1024, 2048, 64
        $region64: #{tpu_custom_call.1} parent=39 // pred_fallthru
          _
      $region40: #{tpu_custom_call.1} parent=5 // pred_fallthru
        _
      %p2351 = scmp.le.s32.totalorder 2, %s19
      // Predicated region
      $region65: #{tpu_custom_call.1} parent=5 // pred_check
        %p2352 = pneg %p2351
      $region66: #{tpu_custom_call.1} parent=5 // pred_check_branch
        %2354 = sbr.rel (%p2352) target = $region68
      $region67: #{tpu_custom_call.1} parent=5 // pred_region
        %s2355 = ssub.s32 %s19, 2
        // Predicated region
        $region69: #{tpu_custom_call.1} parent=67 // pred_check
          %p2356 = pneg %p192
        $region70: #{tpu_custom_call.1} parent=67 // pred_check_branch
          %2358 = sbr.rel (%p2356) target = $region72
        $region71: #{tpu_custom_call.1} parent=67 // pred_region
          %s2359 = sand.u32 %s177, 1
          %s2360 = scalar_lea.sflag [#allocation4], %s2359
          %s2361 = sand.u32 %s177, 1
          %s2362 = smul.addr %s2361, 128
          %s2363 = scalar_lea.vmem [#allocation11], %s2362
          %2364 = dma.done %s2360, 2048
        $region72: #{tpu_custom_call.1} parent=67 // pred_fallthru
          _
      $region68: #{tpu_custom_call.1} parent=5 // pred_fallthru
        _
    $region6: #{tpu_custom_call.1} parent=1 // loop_footer
      %s23 = sadd.s32 1, %s19
    $region7: #{tpu_custom_call.1} parent=1 // loop_footer_branch
      %18 = sbr.rel target = $region3
    $region8: #{tpu_custom_call.1} parent=1 // loop_exit
      _
    %2365 = vsyncpa [#allocation3], 1
    %s2366 = scalar_lea.sflag [#allocation3], 1
    %2367 = vsyncpa %s2366, 1
    %2368 = vsyncpa [#allocation6], 1
    %s2369 = scalar_lea.sflag [#allocation6], 1
    %2370 = vsyncpa %s2369, 1
    %2371 = vsyncpa [#allocation9], 1
    %2372 = vsyncpa [#allocation4], 1
    %s2373 = scalar_lea.sflag [#allocation4], 1
    %2374 = vsyncpa %s2373, 1

</llo_original>
